<compile_context>
chip_gen: v6e
topology: v6e:2x2x1
jax: 0.10.0
libtpu: 0.0.40
codegen_flags: <defaults>
</compile_context>

<pallas_src>
import functools

import jax
import jax.numpy as jnp
from jax import lax
from jax.experimental import pallas as pl
from jax.experimental.pallas import tpu as pltpu


def bottleneck_kernel(H, W, col_ref, x_ref, w1_ref, s1_ref, t1_ref,
                      w2_ref, s2_ref, t2_ref, w3_ref, s3_ref, t3_ref, o_ref):
    HW = H * W

    # ---- conv1 (1x1) + bn1 + relu --------------------------------------
    y1 = jnp.dot(x_ref[0].astype(jnp.bfloat16), w1_ref[...],
                 preferred_element_type=jnp.float32)
    y1 = jnp.maximum(y1 * s1_ref[...] + t1_ref[...], 0.0)         # (HW, C) f32

    # ---- conv2 (3x3, stride=1, pad=1) as a single im2col matmul --------
    # Taps produced by XLU rolls along the flattened sublane axis + boundary
    # masks; no padded copies, no misaligned slices/reshapes.
    col = col_ref[...]                                            # (HW, 1) i32
    idx = lax.broadcasted_iota(jnp.int32, (HW, 1), 0)
    left, right = col == 0, col == W - 1
    top, bot = idx < W, idx >= HW - W

    t_l = jnp.where(left,  0.0, pltpu.roll(y1, 1, axis=0))        # x[h, w-1]
    t_r = jnp.where(right, 0.0, pltpu.roll(y1, HW - 1, axis=0))   # x[h, w+1]
    mid = jnp.concatenate([t_l, y1, t_r], axis=-1)                # (HW, 3C)
    t_t = jnp.where(top, 0.0, pltpu.roll(mid, W, axis=0))         # row h-1
    t_b = jnp.where(bot, 0.0, pltpu.roll(mid, HW - W, axis=0))    # row h+1
    patch = jnp.concatenate([t_t, mid, t_b], axis=-1)             # (HW, 9C)

    y2 = jnp.dot(patch.astype(jnp.bfloat16), w2_ref[...],
                 preferred_element_type=jnp.float32)
    y2 = jnp.maximum(y2 * s2_ref[...] + t2_ref[...], 0.0)         # (HW, C)

    # ---- conv3 (1x1) + bn3 ----------------------------------------------
    y3 = jnp.dot(y2.astype(jnp.bfloat16), w3_ref[...],
                 preferred_element_type=jnp.float32)
    y3 = y3 * s3_ref[...] + t3_ref[...]                           # (HW, Cout)

    # ---- residual add (downsample=None => identity) + relu --------------
    # Re-read the input block here (short live range) instead of keeping it.
    o_ref[0] = jnp.maximum(y3 + x_ref[0], 0.0)


def block_forward(x_nhwc, params):
    """x_nhwc: (N, H, W, Cin) float32; params: folded weights/scales/shifts."""
    N, H, W, Cin = x_nhwc.shape
    w1, s1, t1, w2, s2, t2, w3, s3, t3 = params
    C = w1.shape[1]
    Cout = w3.shape[-1]
    assert Cin == Cout, ("identity residual (downsample=None, stride=1) "
                         "requires in_channels == out_channels * expansion")
    HW = H * W

    # Flatten spatially; wrapper-side reshapes are free glue for the kernel.
    x2 = x_nhwc.reshape(N, HW, Cin)
    col_idx = (jnp.arange(HW, dtype=jnp.int32) % W).reshape(HW, 1)

    # bf16 weights (half the VMEM/DMA bytes, ~2x MXU throughput); 3x3 kernel
    # flattened to (9*C, C) matching the (ky, kx, cin) im2col ordering.
    w1b = w1.astype(jnp.bfloat16)
    w2b = w2.reshape(9 * C, C).astype(jnp.bfloat16)
    w3b = w3.astype(jnp.bfloat16)

    def full(a):
        return pl.BlockSpec(a.shape, lambda n, nd=a.ndim: (0,) * nd)

    # Explicit VMEM budget: double-buffered I/O + weights + in-kernel values.
    f32b, bf16b = 4, 2
    io = 2 * HW * (Cin + Cout) * f32b
    wts = 2 * ((Cin * C + 9 * C * C + C * Cout) * bf16b
               + (4 * C + 2 * Cout) * f32b + HW * 4)
    inter = HW * C * (19 * f32b + 10 * bf16b) + 2 * HW * Cout * f32b
    vmem_limit = int(min(max(2 * (io + wts + inter), 32 << 20), 64 << 20))

    out = pl.pallas_call(
        functools.partial(bottleneck_kernel, H, W),
        out_shape=jax.ShapeDtypeStruct((N, HW, Cout), jnp.float32),
        grid_spec=pltpu.PrefetchScalarGridSpec(
            num_scalar_prefetch=0,
            grid=(N,),
            in_specs=[full(col_idx),
                      pl.BlockSpec((1, HW, Cin), lambda n: (n, 0, 0)),
                      full(w1b), full(s1), full(t1),
                      full(w2b), full(s2), full(t2),
                      full(w3b), full(s3), full(t3)],
            out_specs=pl.BlockSpec((1, HW, Cout), lambda n: (n, 0, 0)),
        ),
        compiler_params=pltpu.CompilerParams(
            dimension_semantics=("parallel",),
            vmem_limit_bytes=vmem_limit),
    )(col_idx, x2, w1b, s1, t1, w2b, s2, t2, w3b, s3, t3)
    return out.reshape(N, H, W, Cout)


# ---------------------------------------------------------------------------
# Parameter construction + pure-JAX reference (for verification)
# ---------------------------------------------------------------------------
_EPS = 1e-5


def fold_bn(conv_bias, gamma, beta, mean, var):
    scale = gamma / jnp.sqrt(var + _EPS)
    shift = beta + scale * (conv_bias - mean)
    return scale.reshape(1, -1), shift.reshape(1, -1)


def make_params(key, in_channels, out_channels):
    C = out_channels
    Cout = out_channels * 4
    ks = jax.random.split(key, 18)
    # conv weights (stored channels-last / HWIO)
    w1 = jax.random.normal(ks[0], (in_channels, C), jnp.float32) * 0.1
    b1 = jax.random.normal(ks[1], (C,), jnp.float32) * 0.1
    w2 = jax.random.normal(ks[2], (3, 3, C, C), jnp.float32) * 0.1
    b2 = jax.random.normal(ks[3], (C,), jnp.float32) * 0.1
    w3 = jax.random.normal(ks[4], (C, Cout), jnp.float32) * 0.1
    b3 = jax.random.normal(ks[5], (Cout,), jnp.float32) * 0.1

    def bn(kg, kb, km, kv, n):
        g = jax.random.uniform(kg, (n,), jnp.float32, 0.5, 1.5)
        be = jax.random.normal(kb, (n,), jnp.float32) * 0.1
        m = jax.random.normal(km, (n,), jnp.float32) * 0.1
        v = jax.random.uniform(kv, (n,), jnp.float32, 0.5, 1.5)
        return g, be, m, v

    bn1 = bn(ks[6], ks[7], ks[8], ks[9], C)
    bn2 = bn(ks[10], ks[11], ks[12], ks[13], C)
    bn3 = bn(ks[14], ks[15], ks[16], ks[17], Cout)
    raw = dict(w1=w1, b1=b1, bn1=bn1, w2=w2, b2=b2, bn2=bn2,
               w3=w3, b3=b3, bn3=bn3)
    s1, t1 = fold_bn(b1, *bn1)
    s2, t2 = fold_bn(b2, *bn2)
    s3, t3 = fold_bn(b3, *bn3)
    folded = (w1, s1, t1, w2, s2, t2, w3, s3, t3)
    return raw, folded


def reference_forward(x_nhwc, raw):
    def bnorm(y, p):
        g, be, m, v = p
        return (y - m) / jnp.sqrt(v + _EPS) * g + be

    hi = jax.lax.Precision.HIGHEST
    y = jnp.einsum('nhwc,cd->nhwd', x_nhwc, raw['w1'], precision=hi) + raw['b1']
    y = jax.nn.relu(bnorm(y, raw['bn1']))
    y = jax.lax.conv_general_dilated(
        y, raw['w2'], window_strides=(1, 1), padding='SAME',
        dimension_numbers=('NHWC', 'HWIO', 'NHWC'), precision=hi) + raw['b2']
    y = jax.nn.relu(bnorm(y, raw['bn2']))
    y = jnp.einsum('nhwc,cd->nhwd', y, raw['w3'], precision=hi) + raw['b3']
    y = bnorm(y, raw['bn3'])
    return jax.nn.relu(y + x_nhwc)


if __name__ == "__main__":
    N, H, W = 2, 16, 16
    out_channels = 4
    in_channels = out_channels * 4          # so identity add is shape-valid

    key = jax.random.PRNGKey(0)
    kx, kp = jax.random.split(key)
    x_nchw = jax.random.normal(kx, (N, in_channels, H, W), jnp.float32)
    x_nhwc = jnp.transpose(x_nchw, (0, 2, 3, 1))     # NCHW -> NHWC (glue)

    raw, folded = make_params(kp, in_channels, out_channels)

    out = jax.block_until_ready(block_forward(x_nhwc, folded))

    ref = reference_forward(x_nhwc, raw)
    err = float(jnp.max(jnp.abs(out - ref)))
    # bf16 MXU operands with f32 accumulation -> slightly looser tolerance.
    assert err < 5e-2, f"mismatch vs reference: max abs err = {err}"

    print("KERNEL_OK")
</pallas_src>

<mosaic_0001>
module attributes {stable_mosaic.version = 11 : i64} {
  func.func @bottleneck_kernel(%arg0: i32, %arg1: memref<256x1xi32, #tpu.memory_space<vmem>>, %arg2: memref<1x256x16xf32, #tpu.memory_space<vmem>>, %arg3: memref<16x4xbf16, #tpu.memory_space<vmem>>, %arg4: memref<1x4xf32, #tpu.memory_space<vmem>>, %arg5: memref<1x4xf32, #tpu.memory_space<vmem>>, %arg6: memref<36x4xbf16, #tpu.memory_space<vmem>>, %arg7: memref<1x4xf32, #tpu.memory_space<vmem>>, %arg8: memref<1x4xf32, #tpu.memory_space<vmem>>, %arg9: memref<4x16xbf16, #tpu.memory_space<vmem>>, %arg10: memref<1x16xf32, #tpu.memory_space<vmem>>, %arg11: memref<1x16xf32, #tpu.memory_space<vmem>>, %arg12: memref<1x256x16xf32, #tpu.memory_space<vmem>>) attributes {dimension_semantics = [#tpu.dimension_semantics<parallel>], iteration_bounds = array<i64: 2>, scalar_prefetch = 0 : i64, scratch_operands = 0 : i64, tpu.core_type = #tpu.core_type<tc>, window_params = [{pipeline_mode = #tpu.pipeline_mode<synchronous>, transform_indices = @transform_0, window_bounds = array<i64: 256, 1>}, {transform_indices = @transform_1, window_bounds = array<i64: 1, 256, 16>}, {pipeline_mode = #tpu.pipeline_mode<synchronous>, transform_indices = @transform_2, window_bounds = array<i64: 16, 4>}, {pipeline_mode = #tpu.pipeline_mode<synchronous>, transform_indices = @transform_3, window_bounds = array<i64: 1, 4>}, {pipeline_mode = #tpu.pipeline_mode<synchronous>, transform_indices = @transform_4, window_bounds = array<i64: 1, 4>}, {pipeline_mode = #tpu.pipeline_mode<synchronous>, transform_indices = @transform_5, window_bounds = array<i64: 36, 4>}, {pipeline_mode = #tpu.pipeline_mode<synchronous>, transform_indices = @transform_6, window_bounds = array<i64: 1, 4>}, {pipeline_mode = #tpu.pipeline_mode<synchronous>, transform_indices = @transform_7, window_bounds = array<i64: 1, 4>}, {pipeline_mode = #tpu.pipeline_mode<synchronous>, transform_indices = @transform_8, window_bounds = array<i64: 4, 16>}, {pipeline_mode = #tpu.pipeline_mode<synchronous>, transform_indices = @transform_9, window_bounds = array<i64: 1, 16>}, {pipeline_mode = #tpu.pipeline_mode<synchronous>, transform_indices = @transform_10, window_bounds = array<i64: 1, 16>}, {transform_indices = @transform_11, window_bounds = array<i64: 1, 256, 16>}]} {
    %c0 = arith.constant 0 : index
    %c0_0 = arith.constant 0 : index
    %c0_1 = arith.constant 0 : index
    %0 = vector.load %arg2[%c0, %c0_0, %c0_1] : memref<1x256x16xf32, #tpu.memory_space<vmem>>, vector<1x256x16xf32>
    %1 = vector.shape_cast %0 : vector<1x256x16xf32> to vector<256x16xf32>
    %2 = arith.truncf %1 : vector<256x16xf32> to vector<256x16xbf16>
    %c0_2 = arith.constant 0 : index
    %c0_3 = arith.constant 0 : index
    %3 = vector.load %arg3[%c0_2, %c0_3] : memref<16x4xbf16, #tpu.memory_space<vmem>>, vector<16x4xbf16>
    %cst = arith.constant dense<0.000000e+00> : vector<256x4xf32>
    %4 = tpu.matmul %2, %3, %cst {dimension_numbers = #tpu.dot_dimension_numbers<[1], [0], [0], [1], [0, 0, 1, 1], [], []>} : vector<256x16xbf16>, vector<16x4xbf16>, vector<256x4xf32> -> vector<256x4xf32>
    %c0_4 = arith.constant 0 : index
    %c0_5 = arith.constant 0 : index
    %5 = vector.load %arg4[%c0_4, %c0_5] : memref<1x4xf32, #tpu.memory_space<vmem>>, vector<1x4xf32>
    %6 = vector.broadcast %5 : vector<1x4xf32> to vector<256x4xf32>
    %7 = arith.mulf %4, %6 : vector<256x4xf32>
    %c0_6 = arith.constant 0 : index
    %c0_7 = arith.constant 0 : index
    %8 = vector.load %arg5[%c0_6, %c0_7] : memref<1x4xf32, #tpu.memory_space<vmem>>, vector<1x4xf32>
    %9 = vector.broadcast %8 : vector<1x4xf32> to vector<256x4xf32>
    %10 = arith.addf %7, %9 : vector<256x4xf32>
    %cst_8 = arith.constant 0.000000e+00 : f32
    %11 = vector.broadcast %cst_8 : f32 to vector<256x4xf32>
    %12 = arith.maximumf %10, %11 : vector<256x4xf32>
    %c0_9 = arith.constant 0 : index
    %c0_10 = arith.constant 0 : index
    %13 = vector.load %arg1[%c0_9, %c0_10] : memref<256x1xi32, #tpu.memory_space<vmem>>, vector<256x1xi32>
    %14 = tpu.iota {dimensions = array<i32: 0>} : vector<256x1xi32>
    %c0_i32 = arith.constant 0 : i32
    %15 = vector.broadcast %c0_i32 : i32 to vector<256x1xi32>
    %16 = arith.cmpi eq, %13, %15 : vector<256x1xi32>
    %c15_i32 = arith.constant 15 : i32
    %17 = vector.broadcast %c15_i32 : i32 to vector<256x1xi32>
    %18 = arith.cmpi eq, %13, %17 : vector<256x1xi32>
    %c16_i32 = arith.constant 16 : i32
    %19 = vector.broadcast %c16_i32 : i32 to vector<256x1xi32>
    %20 = arith.cmpi slt, %14, %19 : vector<256x1xi32>
    %c240_i32 = arith.constant 240 : i32
    %21 = vector.broadcast %c240_i32 : i32 to vector<256x1xi32>
    %22 = arith.cmpi sge, %14, %21 : vector<256x1xi32>
    %c1_i32 = arith.constant 1 : i32
    %23 = tpu.dynamic_rotate %12 by %c1_i32 dim 0 : vector<256x4xf32>, i32 -> vector<256x4xf32>
    %cst_11 = arith.constant 0.000000e+00 : f32
    %24 = vector.shape_cast %16 : vector<256x1xi1> to vector<256x1xi1>
    %25 = vector.broadcast %24 : vector<256x1xi1> to vector<256x4xi1>
    %26 = vector.broadcast %cst_11 : f32 to vector<256x4xf32>
    %27 = arith.select %25, %26, %23 : vector<256x4xi1>, vector<256x4xf32>
    %c255_i32 = arith.constant 255 : i32
    %28 = tpu.dynamic_rotate %12 by %c255_i32 dim 0 : vector<256x4xf32>, i32 -> vector<256x4xf32>
    %cst_12 = arith.constant 0.000000e+00 : f32
    %29 = vector.shape_cast %18 : vector<256x1xi1> to vector<256x1xi1>
    %30 = vector.broadcast %29 : vector<256x1xi1> to vector<256x4xi1>
    %31 = vector.broadcast %cst_12 : f32 to vector<256x4xf32>
    %32 = arith.select %30, %31, %28 : vector<256x4xi1>, vector<256x4xf32>
    %33 = tpu.concatenate %27, %12, %32 in 1 : vector<256x4xf32>, vector<256x4xf32>, vector<256x4xf32> -> vector<256x12xf32>
    %c16_i32_13 = arith.constant 16 : i32
    %34 = tpu.dynamic_rotate %33 by %c16_i32_13 dim 0 : vector<256x12xf32>, i32 -> vector<256x12xf32>
    %cst_14 = arith.constant 0.000000e+00 : f32
    %35 = vector.shape_cast %20 : vector<256x1xi1> to vector<256x1xi1>
    %36 = vector.broadcast %35 : vector<256x1xi1> to vector<256x12xi1>
    %37 = vector.broadcast %cst_14 : f32 to vector<256x12xf32>
    %38 = arith.select %36, %37, %34 : vector<256x12xi1>, vector<256x12xf32>
    %c240_i32_15 = arith.constant 240 : i32
    %39 = tpu.dynamic_rotate %33 by %c240_i32_15 dim 0 : vector<256x12xf32>, i32 -> vector<256x12xf32>
    %cst_16 = arith.constant 0.000000e+00 : f32
    %40 = vector.shape_cast %22 : vector<256x1xi1> to vector<256x1xi1>
    %41 = vector.broadcast %40 : vector<256x1xi1> to vector<256x12xi1>
    %42 = vector.broadcast %cst_16 : f32 to vector<256x12xf32>
    %43 = arith.select %41, %42, %39 : vector<256x12xi1>, vector<256x12xf32>
    %44 = tpu.concatenate %38, %33, %43 in 1 : vector<256x12xf32>, vector<256x12xf32>, vector<256x12xf32> -> vector<256x36xf32>
    %45 = arith.truncf %44 : vector<256x36xf32> to vector<256x36xbf16>
    %c0_17 = arith.constant 0 : index
    %c0_18 = arith.constant 0 : index
    %46 = vector.load %arg6[%c0_17, %c0_18] : memref<36x4xbf16, #tpu.memory_space<vmem>>, vector<36x4xbf16>
    %cst_19 = arith.constant dense<0.000000e+00> : vector<256x4xf32>
    %47 = tpu.matmul %45, %46, %cst_19 {dimension_numbers = #tpu.dot_dimension_numbers<[1], [0], [0], [1], [0, 0, 1, 1], [], []>} : vector<256x36xbf16>, vector<36x4xbf16>, vector<256x4xf32> -> vector<256x4xf32>
    %c0_20 = arith.constant 0 : index
    %c0_21 = arith.constant 0 : index
    %48 = vector.load %arg7[%c0_20, %c0_21] : memref<1x4xf32, #tpu.memory_space<vmem>>, vector<1x4xf32>
    %49 = vector.broadcast %48 : vector<1x4xf32> to vector<256x4xf32>
    %50 = arith.mulf %47, %49 : vector<256x4xf32>
    %c0_22 = arith.constant 0 : index
    %c0_23 = arith.constant 0 : index
    %51 = vector.load %arg8[%c0_22, %c0_23] : memref<1x4xf32, #tpu.memory_space<vmem>>, vector<1x4xf32>
    %52 = vector.broadcast %51 : vector<1x4xf32> to vector<256x4xf32>
    %53 = arith.addf %50, %52 : vector<256x4xf32>
    %cst_24 = arith.constant 0.000000e+00 : f32
    %54 = vector.broadcast %cst_24 : f32 to vector<256x4xf32>
    %55 = arith.maximumf %53, %54 : vector<256x4xf32>
    %56 = arith.truncf %55 : vector<256x4xf32> to vector<256x4xbf16>
    %c0_25 = arith.constant 0 : index
    %c0_26 = arith.constant 0 : index
    %57 = vector.load %arg9[%c0_25, %c0_26] : memref<4x16xbf16, #tpu.memory_space<vmem>>, vector<4x16xbf16>
    %cst_27 = arith.constant dense<0.000000e+00> : vector<256x16xf32>
    %58 = tpu.matmul %56, %57, %cst_27 {dimension_numbers = #tpu.dot_dimension_numbers<[1], [0], [0], [1], [0, 0, 1, 1], [], []>} : vector<256x4xbf16>, vector<4x16xbf16>, vector<256x16xf32> -> vector<256x16xf32>
    %c0_28 = arith.constant 0 : index
    %c0_29 = arith.constant 0 : index
    %59 = vector.load %arg10[%c0_28, %c0_29] : memref<1x16xf32, #tpu.memory_space<vmem>>, vector<1x16xf32>
    %60 = vector.broadcast %59 : vector<1x16xf32> to vector<256x16xf32>
    %61 = arith.mulf %58, %60 : vector<256x16xf32>
    %c0_30 = arith.constant 0 : index
    %c0_31 = arith.constant 0 : index
    %62 = vector.load %arg11[%c0_30, %c0_31] : memref<1x16xf32, #tpu.memory_space<vmem>>, vector<1x16xf32>
    %63 = vector.broadcast %62 : vector<1x16xf32> to vector<256x16xf32>
    %64 = arith.addf %61, %63 : vector<256x16xf32>
    %c0_32 = arith.constant 0 : index
    %c0_33 = arith.constant 0 : index
    %c0_34 = arith.constant 0 : index
    %65 = vector.load %arg2[%c0_32, %c0_33, %c0_34] : memref<1x256x16xf32, #tpu.memory_space<vmem>>, vector<1x256x16xf32>
    %66 = vector.shape_cast %65 : vector<1x256x16xf32> to vector<256x16xf32>
    %67 = arith.addf %64, %66 : vector<256x16xf32>
    %cst_35 = arith.constant 0.000000e+00 : f32
    %68 = vector.broadcast %cst_35 : f32 to vector<256x16xf32>
    %69 = arith.maximumf %67, %68 : vector<256x16xf32>
    %c0_36 = arith.constant 0 : index
    %c0_37 = arith.constant 0 : index
    %c0_38 = arith.constant 0 : index
    %70 = vector.load %arg12[%c0_36, %c0_37, %c0_38] : memref<1x256x16xf32, #tpu.memory_space<vmem>>, vector<1x256x16xf32>
    %71 = vector.shape_cast %70 : vector<1x256x16xf32> to vector<256x16xf32>
    %72 = vector.shape_cast %69 : vector<256x16xf32> to vector<1x256x16xf32>
    tpu.vector_store %arg12[%c0_36, %c0_37, %c0_38], %72 {strides = array<i32>} : memref<1x256x16xf32, #tpu.memory_space<vmem>>, vector<1x256x16xf32>,
    return
  }
  func.func @transform_0(%arg0: i32) -> (i32, i32) {
    %c0_i32 = arith.constant 0 : i32
    %c0_i32_0 = arith.constant 0 : i32
    %c0_i32_1 = arith.constant 0 : i32
    return %c0_i32, %c0_i32_0 : i32, i32
  }
  func.func @transform_1(%arg0: i32) -> (i32, i32, i32) {
    %c0_i32 = arith.constant 0 : i32
    %c0_i32_0 = arith.constant 0 : i32
    %c0_i32_1 = arith.constant 0 : i32
    return %arg0, %c0_i32, %c0_i32_0 : i32, i32, i32
  }
  func.func @transform_2(%arg0: i32) -> (i32, i32) {
    %c0_i32 = arith.constant 0 : i32
    %c0_i32_0 = arith.constant 0 : i32
    %c0_i32_1 = arith.constant 0 : i32
    return %c0_i32, %c0_i32_0 : i32, i32
  }
  func.func @transform_3(%arg0: i32) -> (i32, i32) {
    %c0_i32 = arith.constant 0 : i32
    %c0_i32_0 = arith.constant 0 : i32
    %c0_i32_1 = arith.constant 0 : i32
    return %c0_i32, %c0_i32_0 : i32, i32
  }
  func.func @transform_4(%arg0: i32) -> (i32, i32) {
    %c0_i32 = arith.constant 0 : i32
    %c0_i32_0 = arith.constant 0 : i32
    %c0_i32_1 = arith.constant 0 : i32
    return %c0_i32, %c0_i32_0 : i32, i32
  }
  func.func @transform_5(%arg0: i32) -> (i32, i32) {
    %c0_i32 = arith.constant 0 : i32
    %c0_i32_0 = arith.constant 0 : i32
    %c0_i32_1 = arith.constant 0 : i32
    return %c0_i32, %c0_i32_0 : i32, i32
  }
  func.func @transform_6(%arg0: i32) -> (i32, i32) {
    %c0_i32 = arith.constant 0 : i32
    %c0_i32_0 = arith.constant 0 : i32
    %c0_i32_1 = arith.constant 0 : i32
    return %c0_i32, %c0_i32_0 : i32, i32
  }
  func.func @transform_7(%arg0: i32) -> (i32, i32) {
    %c0_i32 = arith.constant 0 : i32
    %c0_i32_0 = arith.constant 0 : i32
    %c0_i32_1 = arith.constant 0 : i32
    return %c0_i32, %c0_i32_0 : i32, i32
  }
  func.func @transform_8(%arg0: i32) -> (i32, i32) {
    %c0_i32 = arith.constant 0 : i32
    %c0_i32_0 = arith.constant 0 : i32
    %c0_i32_1 = arith.constant 0 : i32
    return %c0_i32, %c0_i32_0 : i32, i32
  }
  func.func @transform_9(%arg0: i32) -> (i32, i32) {
    %c0_i32 = arith.constant 0 : i32
    %c0_i32_0 = arith.constant 0 : i32
    %c0_i32_1 = arith.constant 0 : i32
    return %c0_i32, %c0_i32_0 : i32, i32
  }
  func.func @transform_10(%arg0: i32) -> (i32, i32) {
    %c0_i32 = arith.constant 0 : i32
    %c0_i32_0 = arith.constant 0 : i32
    %c0_i32_1 = arith.constant 0 : i32
    return %c0_i32, %c0_i32_0 : i32, i32
  }
  func.func @transform_11(%arg0: i32) -> (i32, i32, i32) {
    %c0_i32 = arith.constant 0 : i32
    %c0_i32_0 = arith.constant 0 : i32
    %c0_i32_1 = arith.constant 0 : i32
    return %arg0, %c0_i32, %c0_i32_0 : i32, i32, i32
  }
}

</mosaic_0001>

<llo_original>
// kernel: tpu_custom_call.1
$region0: #{tpu_custom_call.1}
  #allocation0 [shape = 'u32[]', space=smem, size = 0x4, offset = 0x4, fixed_abs, tag = 'smem constant byte address 0x4 - core index']
  #allocation1 [shape = 'u32[144,128]{1,0:T(1,128)}', space=vmem, size = 0x12000, scoped, tag = 'internal scratch']
  %s0 = inlined_call_operand.vmem [shape: s32[256,1], index: 0, kind: input, shape index: {}]
  %s1 = inlined_call_operand.vmem [shape: f32[2,256,16], index: 1, kind: input, shape index: {}]
  %s2 = inlined_call_operand.vmem [shape: bf16[16,4], index: 2, kind: input, shape index: {}]
  %s3 = inlined_call_operand.vmem [shape: f32[1,4], index: 3, kind: input, shape index: {}]
  %s4 = inlined_call_operand.vmem [shape: f32[1,4], index: 4, kind: input, shape index: {}]
  %s5 = inlined_call_operand.vmem [shape: bf16[36,4], index: 5, kind: input, shape index: {}]
  %s6 = inlined_call_operand.vmem [shape: f32[1,4], index: 6, kind: input, shape index: {}]
  %s7 = inlined_call_operand.vmem [shape: f32[1,4], index: 7, kind: input, shape index: {}]
  %s8 = inlined_call_operand.vmem [shape: bf16[4,16], index: 8, kind: input, shape index: {}]
  %s9 = inlined_call_operand.vmem [shape: f32[1,16], index: 9, kind: input, shape index: {}]
  %s10 = inlined_call_operand.vmem [shape: f32[1,16], index: 10, kind: input, shape index: {}]
  %s11 = inlined_call_operand.vmem [shape: f32[2,256,16], index: 11, kind: output, shape index: {}]
  %s12 = sld [smem:[#allocation0]]
  $region77: #{tpu_custom_call.1} parent=0
    _
  %s14 = ssub.s32 1, %s12
  %s15 = scalar_select 0, %s14, %s12
  loop: start=0, step=1, limit=4
  $region2: #{tpu_custom_call.1} parent=0 // loop_pre_header
    _
  $region3: #{tpu_custom_call.1} parent=0 // loop_header
    %s17 = sphi 0, %s21
    %p18 = scmp.ge.s32.totalorder %s17, 4
    %s25 = sphi 0, %s25
    %s27 = sphi 0, %s25
    %s28 = sphi 0, %s27
    %s42 = sphi 0, %s28
    %s48 = sphi 0, %s50
    %s51 = sphi 0, %s48
    %s52 = sphi 0, %s51
    %s68 = sphi 0, %s52
    %s72 = sphi 0, %s72
    %s74 = sphi 0, %s72
    %s75 = sphi 0, %s74
    %s89 = sphi 0, %s75
    %s93 = sphi 0, %s93
    %s95 = sphi 0, %s93
    %s96 = sphi 0, %s95
    %s110 = sphi 0, %s96
    %s114 = sphi 0, %s114
    %s116 = sphi 0, %s114
    %s117 = sphi 0, %s116
    %s131 = sphi 0, %s117
    %s135 = sphi 0, %s135
    %s137 = sphi 0, %s135
    %s138 = sphi 0, %s137
    %s152 = sphi 0, %s138
    %s156 = sphi 0, %s156
    %s158 = sphi 0, %s156
    %s159 = sphi 0, %s158
    %s173 = sphi 0, %s159
    %s177 = sphi 0, %s177
    %s179 = sphi 0, %s177
    %s180 = sphi 0, %s179
    %s194 = sphi 0, %s180
    %s198 = sphi 0, %s198
    %s200 = sphi 0, %s198
    %s201 = sphi 0, %s200
    %s215 = sphi 0, %s201
    %s219 = sphi 0, %s219
    %s221 = sphi 0, %s219
    %s222 = sphi 0, %s221
    %s236 = sphi 0, %s222
    %s240 = sphi 0, %s240
    %s242 = sphi 0, %s240
    %s243 = sphi 0, %s242
    %s257 = sphi 0, %s243
    %s263 = sphi 0, %s265
    %s266 = sphi 0, %s263
    %s267 = sphi 0, %s266
    %s283 = sphi 0, %s267
  $region4: #{tpu_custom_call.1} parent=0 // loop_header_branch
    %20 = sbr.rel (%p18) target = $region8
  $region5: #{tpu_custom_call.1} parent=0 // loop_body
    %s22 = ssub.s32 %s17, 1
    %s23 = ssub.s32 %s17, 2
    %s24 = sadd.s32 %s17, 1
    %s26 = sadd.s32 %s25, 1
    %p29 = scmp.eq.s32.totalorder %s17, 1
    %p30 = scmp.ne.s32.totalorder %s25, %s27
    %p31 = scmp.eq.s32.totalorder %s17, 0
    %p32 = por %p30, %p31
    %p33 = scmp.ne.s32.totalorder %s25, %s27
    %p34 = scmp.eq.s32.totalorder %s22, 1
    %p35 = por %p33, %p34
    %p36 = scmp.ne.s32.totalorder %s27, %s28
    %p37 = scmp.eq.s32.totalorder %s22, 0
    %p38 = por %p36, %p37
    %p39 = scmp.ne.s32.totalorder %s27, %s28
    %p40 = scmp.eq.s32.totalorder %s23, 1
    %p41 = por %p39, %p40
    %p43 = scmp.ne.s32.totalorder %s28, %s42
    %p44 = scmp.eq.s32.totalorder %s23, 0
    %p45 = por %p43, %p44
    %s46 = ssub.s32 %s17, %s24
    %p47 = scmp.eq.s32.totalorder %s46, 0
    %s49 = sadd.s32 %s48, 1
    %s50 = scalar_select %p47, %s48, %s49
    %p53 = pneg %p47
    %p54 = scmp.eq.s32.totalorder %s17, 1
    %p55 = por %p53, %p54
    %p56 = scmp.ne.s32.totalorder %s48, %s51
    %p57 = scmp.eq.s32.totalorder %s17, 0
    %p58 = por %p56, %p57
    %p59 = scmp.ne.s32.totalorder %s48, %s51
    %p60 = scmp.eq.s32.totalorder %s22, 1
    %p61 = por %p59, %p60
    %p62 = scmp.ne.s32.totalorder %s51, %s52
    %p63 = scmp.eq.s32.totalorder %s22, 0
    %p64 = por %p62, %p63
    %p65 = scmp.ne.s32.totalorder %s51, %s52
    %p66 = scmp.eq.s32.totalorder %s23, 1
    %p67 = por %p65, %p66
    %p69 = scmp.ne.s32.totalorder %s52, %s68
    %p70 = scmp.eq.s32.totalorder %s23, 0
    %p71 = por %p69, %p70
    %s73 = sadd.s32 %s72, 1
    %p76 = scmp.eq.s32.totalorder %s17, 1
    %p77 = scmp.ne.s32.totalorder %s72, %s74
    %p78 = scmp.eq.s32.totalorder %s17, 0
    %p79 = por %p77, %p78
    %p80 = scmp.ne.s32.totalorder %s72, %s74
    %p81 = scmp.eq.s32.totalorder %s22, 1
    %p82 = por %p80, %p81
    %p83 = scmp.ne.s32.totalorder %s74, %s75
    %p84 = scmp.eq.s32.totalorder %s22, 0
    %p85 = por %p83, %p84
    %p86 = scmp.ne.s32.totalorder %s74, %s75
    %p87 = scmp.eq.s32.totalorder %s23, 1
    %p88 = por %p86, %p87
    %p90 = scmp.ne.s32.totalorder %s75, %s89
    %p91 = scmp.eq.s32.totalorder %s23, 0
    %p92 = por %p90, %p91
    %s94 = sadd.s32 %s93, 1
    %p97 = scmp.eq.s32.totalorder %s17, 1
    %p98 = scmp.ne.s32.totalorder %s93, %s95
    %p99 = scmp.eq.s32.totalorder %s17, 0
    %p100 = por %p98, %p99
    %p101 = scmp.ne.s32.totalorder %s93, %s95
    %p102 = scmp.eq.s32.totalorder %s22, 1
    %p103 = por %p101, %p102
    %p104 = scmp.ne.s32.totalorder %s95, %s96
    %p105 = scmp.eq.s32.totalorder %s22, 0
    %p106 = por %p104, %p105
    %p107 = scmp.ne.s32.totalorder %s95, %s96
    %p108 = scmp.eq.s32.totalorder %s23, 1
    %p109 = por %p107, %p108
    %p111 = scmp.ne.s32.totalorder %s96, %s110
    %p112 = scmp.eq.s32.totalorder %s23, 0
    %p113 = por %p111, %p112
    %s115 = sadd.s32 %s114, 1
    %p118 = scmp.eq.s32.totalorder %s17, 1
    %p119 = scmp.ne.s32.totalorder %s114, %s116
    %p120 = scmp.eq.s32.totalorder %s17, 0
    %p121 = por %p119, %p120
    %p122 = scmp.ne.s32.totalorder %s114, %s116
    %p123 = scmp.eq.s32.totalorder %s22, 1
    %p124 = por %p122, %p123
    %p125 = scmp.ne.s32.totalorder %s116, %s117
    %p126 = scmp.eq.s32.totalorder %s22, 0
    %p127 = por %p125, %p126
    %p128 = scmp.ne.s32.totalorder %s116, %s117
    %p129 = scmp.eq.s32.totalorder %s23, 1
    %p130 = por %p128, %p129
    %p132 = scmp.ne.s32.totalorder %s117, %s131
    %p133 = scmp.eq.s32.totalorder %s23, 0
    %p134 = por %p132, %p133
    %s136 = sadd.s32 %s135, 1
    %p139 = scmp.eq.s32.totalorder %s17, 1
    %p140 = scmp.ne.s32.totalorder %s135, %s137
    %p141 = scmp.eq.s32.totalorder %s17, 0
    %p142 = por %p140, %p141
    %p143 = scmp.ne.s32.totalorder %s135, %s137
    %p144 = scmp.eq.s32.totalorder %s22, 1
    %p145 = por %p143, %p144
    %p146 = scmp.ne.s32.totalorder %s137, %s138
    %p147 = scmp.eq.s32.totalorder %s22, 0
    %p148 = por %p146, %p147
    %p149 = scmp.ne.s32.totalorder %s137, %s138
    %p150 = scmp.eq.s32.totalorder %s23, 1
    %p151 = por %p149, %p150
    %p153 = scmp.ne.s32.totalorder %s138, %s152
    %p154 = scmp.eq.s32.totalorder %s23, 0
    %p155 = por %p153, %p154
    %s157 = sadd.s32 %s156, 1
    %p160 = scmp.eq.s32.totalorder %s17, 1
    %p161 = scmp.ne.s32.totalorder %s156, %s158
    %p162 = scmp.eq.s32.totalorder %s17, 0
    %p163 = por %p161, %p162
    %p164 = scmp.ne.s32.totalorder %s156, %s158
    %p165 = scmp.eq.s32.totalorder %s22, 1
    %p166 = por %p164, %p165
    %p167 = scmp.ne.s32.totalorder %s158, %s159
    %p168 = scmp.eq.s32.totalorder %s22, 0
    %p169 = por %p167, %p168
    %p170 = scmp.ne.s32.totalorder %s158, %s159
    %p171 = scmp.eq.s32.totalorder %s23, 1
    %p172 = por %p170, %p171
    %p174 = scmp.ne.s32.totalorder %s159, %s173
    %p175 = scmp.eq.s32.totalorder %s23, 0
    %p176 = por %p174, %p175
    %s178 = sadd.s32 %s177, 1
    %p181 = scmp.eq.s32.totalorder %s17, 1
    %p182 = scmp.ne.s32.totalorder %s177, %s179
    %p183 = scmp.eq.s32.totalorder %s17, 0
    %p184 = por %p182, %p183
    %p185 = scmp.ne.s32.totalorder %s177, %s179
    %p186 = scmp.eq.s32.totalorder %s22, 1
    %p187 = por %p185, %p186
    %p188 = scmp.ne.s32.totalorder %s179, %s180
    %p189 = scmp.eq.s32.totalorder %s22, 0
    %p190 = por %p188, %p189
    %p191 = scmp.ne.s32.totalorder %s179, %s180
    %p192 = scmp.eq.s32.totalorder %s23, 1
    %p193 = por %p191, %p192
    %p195 = scmp.ne.s32.totalorder %s180, %s194
    %p196 = scmp.eq.s32.totalorder %s23, 0
    %p197 = por %p195, %p196
    %s199 = sadd.s32 %s198, 1
    %p202 = scmp.eq.s32.totalorder %s17, 1
    %p203 = scmp.ne.s32.totalorder %s198, %s200
    %p204 = scmp.eq.s32.totalorder %s17, 0
    %p205 = por %p203, %p204
    %p206 = scmp.ne.s32.totalorder %s198, %s200
    %p207 = scmp.eq.s32.totalorder %s22, 1
    %p208 = por %p206, %p207
    %p209 = scmp.ne.s32.totalorder %s200, %s201
    %p210 = scmp.eq.s32.totalorder %s22, 0
    %p211 = por %p209, %p210
    %p212 = scmp.ne.s32.totalorder %s200, %s201
    %p213 = scmp.eq.s32.totalorder %s23, 1
    %p214 = por %p212, %p213
    %p216 = scmp.ne.s32.totalorder %s201, %s215
    %p217 = scmp.eq.s32.totalorder %s23, 0
    %p218 = por %p216, %p217
    %s220 = sadd.s32 %s219, 1
    %p223 = scmp.eq.s32.totalorder %s17, 1
    %p224 = scmp.ne.s32.totalorder %s219, %s221
    %p225 = scmp.eq.s32.totalorder %s17, 0
    %p226 = por %p224, %p225
    %p227 = scmp.ne.s32.totalorder %s219, %s221
    %p228 = scmp.eq.s32.totalorder %s22, 1
    %p229 = por %p227, %p228
    %p230 = scmp.ne.s32.totalorder %s221, %s222
    %p231 = scmp.eq.s32.totalorder %s22, 0
    %p232 = por %p230, %p231
    %p233 = scmp.ne.s32.totalorder %s221, %s222
    %p234 = scmp.eq.s32.totalorder %s23, 1
    %p235 = por %p233, %p234
    %p237 = scmp.ne.s32.totalorder %s222, %s236
    %p238 = scmp.eq.s32.totalorder %s23, 0
    %p239 = por %p237, %p238
    %s241 = sadd.s32 %s240, 1
    %p244 = scmp.eq.s32.totalorder %s17, 1
    %p245 = scmp.ne.s32.totalorder %s240, %s242
    %p246 = scmp.eq.s32.totalorder %s17, 0
    %p247 = por %p245, %p246
    %p248 = scmp.ne.s32.totalorder %s240, %s242
    %p249 = scmp.eq.s32.totalorder %s22, 1
    %p250 = por %p248, %p249
    %p251 = scmp.ne.s32.totalorder %s242, %s243
    %p252 = scmp.eq.s32.totalorder %s22, 0
    %p253 = por %p251, %p252
    %p254 = scmp.ne.s32.totalorder %s242, %s243
    %p255 = scmp.eq.s32.totalorder %s23, 1
    %p256 = por %p254, %p255
    %p258 = scmp.ne.s32.totalorder %s243, %s257
    %p259 = scmp.eq.s32.totalorder %s23, 0
    %p260 = por %p258, %p259
    %s261 = ssub.s32 %s17, %s24
    %p262 = scmp.eq.s32.totalorder %s261, 0
    %s264 = sadd.s32 %s263, 1
    %s265 = scalar_select %p262, %s263, %s264
    %p268 = pneg %p262
    %p269 = scmp.eq.s32.totalorder %s17, 1
    %p270 = por %p268, %p269
    %p271 = scmp.ne.s32.totalorder %s263, %s266
    %p272 = scmp.eq.s32.totalorder %s17, 0
    %p273 = por %p271, %p272
    %p274 = scmp.ne.s32.totalorder %s263, %s266
    %p275 = scmp.eq.s32.totalorder %s22, 1
    %p276 = por %p274, %p275
    %p277 = scmp.ne.s32.totalorder %s266, %s267
    %p278 = scmp.eq.s32.totalorder %s22, 0
    %p279 = por %p277, %p278
    %p280 = scmp.ne.s32.totalorder %s266, %s267
    %p281 = scmp.eq.s32.totalorder %s23, 1
    %p282 = por %p280, %p281
    %p284 = scmp.ne.s32.totalorder %s267, %s283
    %p285 = scmp.eq.s32.totalorder %s23, 0
    %p286 = por %p284, %p285
    %p287 = scmp.le.s32.totalorder 1, %s17
    %p288 = scmp.lt.s32.totalorder %s17, 3
    %p289 = pnand %p287, %p288
    %p290 = pneg %p289
    // Predicated region
    $region9: #{tpu_custom_call.1} parent=5 // pred_check
      _
    $region10: #{tpu_custom_call.1} parent=5 // pred_check_branch
      %292 = sbr.rel (%p289) target = $region12
    $region11: #{tpu_custom_call.1} parent=5 // pred_region
      %s293 = ssub.s32 %s17, 1
      // Predicated region
      $region13: #{tpu_custom_call.1} parent=11 // pred_check
        %p294 = pneg %p38
      $region14: #{tpu_custom_call.1} parent=11 // pred_check_branch
        %296 = sbr.rel (%p294) target = $region16
      $region15: #{tpu_custom_call.1} parent=11 // pred_region
        _
      $region16: #{tpu_custom_call.1} parent=11 // pred_fallthru
        _
      // Predicated region
      $region17: #{tpu_custom_call.1} parent=11 // pred_check
        %p297 = pneg %p85
      $region18: #{tpu_custom_call.1} parent=11 // pred_check_branch
        %299 = sbr.rel (%p297) target = $region20
      $region19: #{tpu_custom_call.1} parent=11 // pred_region
        _
      $region20: #{tpu_custom_call.1} parent=11 // pred_fallthru
        _
      // Predicated region
      $region21: #{tpu_custom_call.1} parent=11 // pred_check
        %p300 = pneg %p106
      $region22: #{tpu_custom_call.1} parent=11 // pred_check_branch
        %302 = sbr.rel (%p300) target = $region24
      $region23: #{tpu_custom_call.1} parent=11 // pred_region
        _
      $region24: #{tpu_custom_call.1} parent=11 // pred_fallthru
        _
      // Predicated region
      $region25: #{tpu_custom_call.1} parent=11 // pred_check
        %p303 = pneg %p127
      $region26: #{tpu_custom_call.1} parent=11 // pred_check_branch
        %305 = sbr.rel (%p303) target = $region28
      $region27: #{tpu_custom_call.1} parent=11 // pred_region
        _
      $region28: #{tpu_custom_call.1} parent=11 // pred_fallthru
        _
      // Predicated region
      $region29: #{tpu_custom_call.1} parent=11 // pred_check
        %p306 = pneg %p148
      $region30: #{tpu_custom_call.1} parent=11 // pred_check_branch
        %308 = sbr.rel (%p306) target = $region32
      $region31: #{tpu_custom_call.1} parent=11 // pred_region
        _
      $region32: #{tpu_custom_call.1} parent=11 // pred_fallthru
        _
      // Predicated region
      $region33: #{tpu_custom_call.1} parent=11 // pred_check
        %p309 = pneg %p169
      $region34: #{tpu_custom_call.1} parent=11 // pred_check_branch
        %311 = sbr.rel (%p309) target = $region36
      $region35: #{tpu_custom_call.1} parent=11 // pred_region
        _
      $region36: #{tpu_custom_call.1} parent=11 // pred_fallthru
        _
      // Predicated region
      $region37: #{tpu_custom_call.1} parent=11 // pred_check
        %p312 = pneg %p190
      $region38: #{tpu_custom_call.1} parent=11 // pred_check_branch
        %314 = sbr.rel (%p312) target = $region40
      $region39: #{tpu_custom_call.1} parent=11 // pred_region
        _
      $region40: #{tpu_custom_call.1} parent=11 // pred_fallthru
        _
      // Predicated region
      $region41: #{tpu_custom_call.1} parent=11 // pred_check
        %p315 = pneg %p211
      $region42: #{tpu_custom_call.1} parent=11 // pred_check_branch
        %317 = sbr.rel (%p315) target = $region44
      $region43: #{tpu_custom_call.1} parent=11 // pred_region
        _
      $region44: #{tpu_custom_call.1} parent=11 // pred_fallthru
        _
      // Predicated region
      $region45: #{tpu_custom_call.1} parent=11 // pred_check
        %p318 = pneg %p232
      $region46: #{tpu_custom_call.1} parent=11 // pred_check_branch
        %320 = sbr.rel (%p318) target = $region48
      $region47: #{tpu_custom_call.1} parent=11 // pred_region
        _
      $region48: #{tpu_custom_call.1} parent=11 // pred_fallthru
        _
      // Predicated region
      $region49: #{tpu_custom_call.1} parent=11 // pred_check
        %p321 = pneg %p253
      $region50: #{tpu_custom_call.1} parent=11 // pred_check_branch
        %323 = sbr.rel (%p321) target = $region52
      $region51: #{tpu_custom_call.1} parent=11 // pred_region
        _
      $region52: #{tpu_custom_call.1} parent=11 // pred_fallthru
        _
    $region12: #{tpu_custom_call.1} parent=5 // pred_fallthru
      _
    %p324 = scmp.lt.s32.totalorder %s17, 2
    // Predicated region
    $region53: #{tpu_custom_call.1} parent=5 // pred_check
      %p325 = pneg %p324
    $region54: #{tpu_custom_call.1} parent=5 // pred_check_branch
      %327 = sbr.rel (%p325) target = $region56
    $region55: #{tpu_custom_call.1} parent=5 // pred_region
      // Predicated region
      $region57: #{tpu_custom_call.1} parent=55 // pred_check
        %p328 = pneg %p58
      $region58: #{tpu_custom_call.1} parent=55 // pred_check_branch
        %330 = sbr.rel (%p328) target = $region60
      $region59: #{tpu_custom_call.1} parent=55 // pred_region
        %p331 = scmp.lt.s32.totalorder %s17, 1
        %s332 = scalar_select %p331, %s17, 1
        %s333 = smul.addr %s332, 32
        %s334 = smul.addr %s333, 8
        %s335 = scalar_lea.vmem %s1, %s334
      $region60: #{tpu_custom_call.1} parent=55 // pred_fallthru
        _
    $region56: #{tpu_custom_call.1} parent=5 // pred_fallthru
      _
    %p336 = scmp.le.s32.totalorder 1, %s17
    %p337 = scmp.lt.s32.totalorder %s17, 3
    %p338 = pnand %p336, %p337
    %p339 = pneg %p338
    // Predicated region
    $region61: #{tpu_custom_call.1} parent=5 // pred_check
      _
    $region62: #{tpu_custom_call.1} parent=5 // pred_check_branch
      %341 = sbr.rel (%p338) target = $region64
    $region63: #{tpu_custom_call.1} parent=5 // pred_region
      %s342 = ssub.s32 %s17, 1
      %p343 = pneg %p38
      %p344 = pneg %p35
      %p345 = scmp.lt.s32.totalorder %s22, 1
      %s346 = scalar_select %p345, %s22, 1
      %s347 = smul.addr %s346, 32
      %s348 = smul.addr %s347, 8
      %s349 = scalar_lea.vmem %s1, %s348
      %p350 = pneg %p64
      %p351 = pneg %p61
      %p352 = pneg %p85
      %p353 = pneg %p82
      %p354 = pneg %p106
      %p355 = pneg %p103
      %p356 = pneg %p127
      %p357 = pneg %p124
      %p358 = pneg %p148
      %p359 = pneg %p145
      %p360 = pneg %p169
      %p361 = pneg %p166
      %p362 = pneg %p190
      %p363 = pneg %p187
      %p364 = pneg %p211
      %p365 = pneg %p208
      %p366 = pneg %p232
      %p367 = pneg %p229
      %p368 = pneg %p253
      %p369 = pneg %p250
      %p370 = pneg %p279
      %p371 = pneg %p276
      %p372 = scmp.lt.s32.totalorder %s22, 1
      %s373 = scalar_select %p372, %s22, 1
      %s374 = smul.addr %s373, 32
      %s375 = smul.addr %s374, 8
      %s376 = scalar_lea.vmem %s11, %s375
      %p377 = scmp.lt.s32.totalorder %s22, 1
      %s378 = scalar_select %p377, %s22, 1
      %s379 = smul.addr %s378, 32
      %s380 = smul.addr %s379, 8
      %s381 = scalar_lea.vmem %s1, %s380
      %p382 = scmp.lt.s32.totalorder %s22, 1
      %s383 = scalar_select %p382, %s22, 1
      %s384 = smul.addr %s383, 32
      %s385 = smul.addr %s384, 8
      %s386 = scalar_lea.vmem %s11, %s385
      %v388 = vld [vmem:[%s381] sm:$0xff]
      %v389 = vld [vmem:[%s381 + $0x8] sm:$0xff]
      %v390 = vld [vmem:[%s381 + $0x10] sm:$0xff]
      %v391 = vld [vmem:[%s381 + $0x18] sm:$0xff]
      %v392 = vld [vmem:[%s381 + $0x20] sm:$0xff]
      %v393 = vld [vmem:[%s381 + $0x28] sm:$0xff]
      %v394 = vld [vmem:[%s381 + $0x30] sm:$0xff]
      %v395 = vld [vmem:[%s381 + $0x38] sm:$0xff]
      %v396 = vld [vmem:[%s381 + $0x40] sm:$0xff]
      %v397 = vld [vmem:[%s381 + $0x48] sm:$0xff]
      %v398 = vld [vmem:[%s381 + $0x50] sm:$0xff]
      %v399 = vld [vmem:[%s381 + $0x58] sm:$0xff]
      %v400 = vld [vmem:[%s381 + $0x60] sm:$0xff]
      %v401 = vld [vmem:[%s381 + $0x68] sm:$0xff]
      %v402 = vld [vmem:[%s381 + $0x70] sm:$0xff]
      %v403 = vld [vmem:[%s381 + $0x78] sm:$0xff]
      %v404 = vld [vmem:[%s381 + $0x80] sm:$0xff]
      %v405 = vld [vmem:[%s381 + $0x88] sm:$0xff]
      %v406 = vld [vmem:[%s381 + $0x90] sm:$0xff]
      %v407 = vld [vmem:[%s381 + $0x98] sm:$0xff]
      %v408 = vld [vmem:[%s381 + $0xa0] sm:$0xff]
      %v409 = vld [vmem:[%s381 + $0xa8] sm:$0xff]
      %v410 = vld [vmem:[%s381 + $0xb0] sm:$0xff]
      %v411 = vld [vmem:[%s381 + $0xb8] sm:$0xff]
      %v412 = vld [vmem:[%s381 + $0xc0] sm:$0xff]
      %v413 = vld [vmem:[%s381 + $0xc8] sm:$0xff]
      %v414 = vld [vmem:[%s381 + $0xd0] sm:$0xff]
      %v415 = vld [vmem:[%s381 + $0xd8] sm:$0xff]
      %v416 = vld [vmem:[%s381 + $0xe0] sm:$0xff]
      %v417 = vld [vmem:[%s381 + $0xe8] sm:$0xff]
      %v418 = vld [vmem:[%s381 + $0xf0] sm:$0xff]
      %v419 = vld [vmem:[%s381 + $0xf8] sm:$0xff]
      %v420 = vpack.c.bf16 %v389, %v388
      %v421 = vpack.c.bf16 %v391, %v390
      %v422 = vpack.c.bf16 %v393, %v392
      %v423 = vpack.c.bf16 %v395, %v394
      %v424 = vpack.c.bf16 %v397, %v396
      %v425 = vpack.c.bf16 %v399, %v398
      %v426 = vpack.c.bf16 %v401, %v400
      %v427 = vpack.c.bf16 %v403, %v402
      %v428 = vpack.c.bf16 %v405, %v404
      %v429 = vpack.c.bf16 %v407, %v406
      %v430 = vpack.c.bf16 %v409, %v408
      %v431 = vpack.c.bf16 %v411, %v410
      %v432 = vpack.c.bf16 %v413, %v412
      %v433 = vpack.c.bf16 %v415, %v414
      %v434 = vpack.c.bf16 %v417, %v416
      %v435 = vpack.c.bf16 %v419, %v418
      %v436 = vld [vmem:[%s2] sm:$0xf]
      %v437 = vld [vmem:[%s2 + $0x4] sm:$0xf]
      %v440 = vunpack.c.l.b16 %v436
      %v441 = vunpack.c.l.b16 %v437
      %v442 = vpack.c.b16 %v441, %v440
      %vm444 = vcmask 130048
      %v446 = vsel %vm444, %v420, 0
      %v449 = vsel %vm444, %v421, 0
      %v452 = vsel %vm444, %v422, 0
      %v455 = vsel %vm444, %v423, 0
      %v458 = vsel %vm444, %v424, 0
      %v461 = vsel %vm444, %v425, 0
      %v464 = vsel %vm444, %v426, 0
      %v467 = vsel %vm444, %v427, 0
      %v470 = vsel %vm444, %v428, 0
      %v473 = vsel %vm444, %v429, 0
      %v476 = vsel %vm444, %v430, 0
      %v479 = vsel %vm444, %v431, 0
      %v482 = vsel %vm444, %v432, 0
      %v485 = vsel %vm444, %v433, 0
      %v488 = vsel %vm444, %v434, 0
      %v491 = vsel %vm444, %v435, 0
      %493 = vmatprep.subr.bf16.mxu0 0
      %494 = vmatpush1.bf16.msra.mxu0 0
      %495 = vmatprep.subr.bf16.mxu0 0
      %496 = vmatpush1.bf16.msra.mxu0 0
      %497 = vmatprep.subr.bf16.mxu0 0
      %498 = vmatpush1.bf16.msra.mxu0 0
      %499 = vmatprep.subr.bf16.mxu0 0
      %500 = vmatpush1.bf16.msra.mxu0 0
      %501 = vmatprep.subr.bf16.mxu0 0
      %502 = vmatpush1.bf16.msra.mxu0 0
      %503 = vmatprep.subr.bf16.mxu0 0
      %504 = vmatpush1.bf16.msra.mxu0 0
      %505 = vmatprep.subr.bf16.mxu0 0
      %506 = vmatpush1.bf16.msra.mxu0 0
      %507 = vmatprep.subr.bf16.mxu0 0
      %508 = vmatpush1.bf16.msra.mxu0 %v442
      %509 = vmatprep.subr.bf16.mxu0 0
      %510 = vmatpush2.bf16.msra.mxu0 0
      %511 = vmatprep.subr.bf16.mxu0 0
      %512 = vmatpush2.bf16.msra.mxu0 0
      %513 = vmatprep.subr.bf16.mxu0 0
      %514 = vmatpush2.bf16.msra.mxu0 0
      %515 = vmatprep.subr.bf16.mxu0 0
      %516 = vmatpush2.bf16.msra.mxu0 0
      %517 = vmatprep.subr.bf16.mxu0 0
      %518 = vmatpush2.bf16.msra.mxu0 0
      %519 = vmatprep.subr.bf16.mxu0 0
      %520 = vmatpush2.bf16.msra.mxu0 0
      %521 = vmatprep.subr.bf16.mxu0 0
      %522 = vmatpush2.bf16.msra.mxu0 0
      %523 = vmatprep.subr.bf16.mxu0 0
      %524 = vmatpush2.bf16.msra.mxu0 0
      %525 = vmatprep.mubr.bf16.mxu0 0
      %526 = vmatmul.mubr.bf16.gmra.mxu0 %v446
      %v527 = vpop.f32.mrf.mxu0
      %v528 = vadd.f32 0.0, %v527
      %v529 = vpop.f32.mrf.mxu0
      %v530 = vpop.f32.mrf.mxu0
      %v531 = vadd.f32 0.0, %v530
      %v532 = vpop.f32.mrf.mxu0
      %533 = vmatprep.mubr.bf16.mxu0 0
      %534 = vmatmul.mubr.bf16.gmra.mxu0 %v449
      %v535 = vpop.f32.mrf.mxu0
      %v536 = vadd.f32 0.0, %v535
      %v537 = vpop.f32.mrf.mxu0
      %v538 = vpop.f32.mrf.mxu0
      %v539 = vadd.f32 0.0, %v538
      %v540 = vpop.f32.mrf.mxu0
      %541 = vmatprep.mubr.bf16.mxu0 0
      %542 = vmatmul.mubr.bf16.gmra.mxu0 %v452
      %v543 = vpop.f32.mrf.mxu0
      %v544 = vadd.f32 0.0, %v543
      %v545 = vpop.f32.mrf.mxu0
      %v546 = vpop.f32.mrf.mxu0
      %v547 = vadd.f32 0.0, %v546
      %v548 = vpop.f32.mrf.mxu0
      %549 = vmatprep.mubr.bf16.mxu0 0
      %550 = vmatmul.mubr.bf16.gmra.mxu0 %v455
      %v551 = vpop.f32.mrf.mxu0
      %v552 = vadd.f32 0.0, %v551
      %v553 = vpop.f32.mrf.mxu0
      %v554 = vpop.f32.mrf.mxu0
      %v555 = vadd.f32 0.0, %v554
      %v556 = vpop.f32.mrf.mxu0
      %557 = vmatprep.mubr.bf16.mxu0 0
      %558 = vmatmul.mubr.bf16.gmra.mxu0 %v458
      %v559 = vpop.f32.mrf.mxu0
      %v560 = vadd.f32 0.0, %v559
      %v561 = vpop.f32.mrf.mxu0
      %v562 = vpop.f32.mrf.mxu0
      %v563 = vadd.f32 0.0, %v562
      %v564 = vpop.f32.mrf.mxu0
      %565 = vmatprep.mubr.bf16.mxu0 0
      %566 = vmatmul.mubr.bf16.gmra.mxu0 %v461
      %v567 = vpop.f32.mrf.mxu0
      %v568 = vadd.f32 0.0, %v567
      %v569 = vpop.f32.mrf.mxu0
      %v570 = vpop.f32.mrf.mxu0
      %v571 = vadd.f32 0.0, %v570
      %v572 = vpop.f32.mrf.mxu0
      %573 = vmatprep.mubr.bf16.mxu0 0
      %574 = vmatmul.mubr.bf16.gmra.mxu0 %v464
      %v575 = vpop.f32.mrf.mxu0
      %v576 = vadd.f32 0.0, %v575
      %v577 = vpop.f32.mrf.mxu0
      %v578 = vpop.f32.mrf.mxu0
      %v579 = vadd.f32 0.0, %v578
      %v580 = vpop.f32.mrf.mxu0
      %581 = vmatprep.mubr.bf16.mxu0 0
      %582 = vmatmul.mubr.bf16.gmra.mxu0 %v467
      %v583 = vpop.f32.mrf.mxu0
      %v584 = vadd.f32 0.0, %v583
      %v585 = vpop.f32.mrf.mxu0
      %v586 = vpop.f32.mrf.mxu0
      %v587 = vadd.f32 0.0, %v586
      %v588 = vpop.f32.mrf.mxu0
      %589 = vmatprep.mubr.bf16.mxu0 0
      %590 = vmatmul.mubr.bf16.gmra.mxu0 %v470
      %v591 = vpop.f32.mrf.mxu0
      %v592 = vadd.f32 0.0, %v591
      %v593 = vpop.f32.mrf.mxu0
      %v594 = vpop.f32.mrf.mxu0
      %v595 = vadd.f32 0.0, %v594
      %v596 = vpop.f32.mrf.mxu0
      %597 = vmatprep.mubr.bf16.mxu0 0
      %598 = vmatmul.mubr.bf16.gmra.mxu0 %v473
      %v599 = vpop.f32.mrf.mxu0
      %v600 = vadd.f32 0.0, %v599
      %v601 = vpop.f32.mrf.mxu0
      %v602 = vpop.f32.mrf.mxu0
      %v603 = vadd.f32 0.0, %v602
      %v604 = vpop.f32.mrf.mxu0
      %605 = vmatprep.mubr.bf16.mxu0 0
      %606 = vmatmul.mubr.bf16.gmra.mxu0 %v476
      %v607 = vpop.f32.mrf.mxu0
      %v608 = vadd.f32 0.0, %v607
      %v609 = vpop.f32.mrf.mxu0
      %v610 = vpop.f32.mrf.mxu0
      %v611 = vadd.f32 0.0, %v610
      %v612 = vpop.f32.mrf.mxu0
      %613 = vmatprep.mubr.bf16.mxu0 0
      %614 = vmatmul.mubr.bf16.gmra.mxu0 %v479
      %v615 = vpop.f32.mrf.mxu0
      %v616 = vadd.f32 0.0, %v615
      %v617 = vpop.f32.mrf.mxu0
      %v618 = vpop.f32.mrf.mxu0
      %v619 = vadd.f32 0.0, %v618
      %v620 = vpop.f32.mrf.mxu0
      %621 = vmatprep.mubr.bf16.mxu0 0
      %622 = vmatmul.mubr.bf16.gmra.mxu0 %v482
      %v623 = vpop.f32.mrf.mxu0
      %v624 = vadd.f32 0.0, %v623
      %v625 = vpop.f32.mrf.mxu0
      %v626 = vpop.f32.mrf.mxu0
      %v627 = vadd.f32 0.0, %v626
      %v628 = vpop.f32.mrf.mxu0
      %629 = vmatprep.mubr.bf16.mxu0 0
      %630 = vmatmul.mubr.bf16.gmra.mxu0 %v485
      %v631 = vpop.f32.mrf.mxu0
      %v632 = vadd.f32 0.0, %v631
      %v633 = vpop.f32.mrf.mxu0
      %v634 = vpop.f32.mrf.mxu0
      %v635 = vadd.f32 0.0, %v634
      %v636 = vpop.f32.mrf.mxu0
      %637 = vmatprep.mubr.bf16.mxu0 0
      %638 = vmatmul.mubr.bf16.gmra.mxu0 %v488
      %v639 = vpop.f32.mrf.mxu0
      %v640 = vadd.f32 0.0, %v639
      %v641 = vpop.f32.mrf.mxu0
      %v642 = vpop.f32.mrf.mxu0
      %v643 = vadd.f32 0.0, %v642
      %v644 = vpop.f32.mrf.mxu0
      %645 = vmatprep.mubr.bf16.mxu0 0
      %646 = vmatmul.mubr.bf16.gmra.mxu0 %v491
      %v647 = vpop.f32.mrf.mxu0
      %v648 = vadd.f32 0.0, %v647
      %v649 = vpop.f32.mrf.mxu0
      %v650 = vpop.f32.mrf.mxu0
      %v651 = vadd.f32 0.0, %v650
      %v652 = vpop.f32.mrf.mxu0
      %653 = vdwg.mxu0
      %v654 = vld [vmem:[%s3] sm:$0x1]
      %v656 = vlaneseq
      %v657 = vshrl.u32 %v656, 7
      %v658 = vsub.s32 0, %v657
      %v659 = vrot.slane %v654, %v658
      %v661 = vmul.f32 %v528, %v659
      %v662 = vmul.f32 %v531, %v659
      %v663 = vmul.f32 %v536, %v659
      %v664 = vmul.f32 %v539, %v659
      %v665 = vmul.f32 %v544, %v659
      %v666 = vmul.f32 %v547, %v659
      %v667 = vmul.f32 %v552, %v659
      %v668 = vmul.f32 %v555, %v659
      %v669 = vmul.f32 %v560, %v659
      %v670 = vmul.f32 %v563, %v659
      %v671 = vmul.f32 %v568, %v659
      %v672 = vmul.f32 %v571, %v659
      %v673 = vmul.f32 %v576, %v659
      %v674 = vmul.f32 %v579, %v659
      %v675 = vmul.f32 %v584, %v659
      %v676 = vmul.f32 %v587, %v659
      %v677 = vmul.f32 %v592, %v659
      %v678 = vmul.f32 %v595, %v659
      %v679 = vmul.f32 %v600, %v659
      %v680 = vmul.f32 %v603, %v659
      %v681 = vmul.f32 %v608, %v659
      %v682 = vmul.f32 %v611, %v659
      %v683 = vmul.f32 %v616, %v659
      %v684 = vmul.f32 %v619, %v659
      %v685 = vmul.f32 %v624, %v659
      %v686 = vmul.f32 %v627, %v659
      %v687 = vmul.f32 %v632, %v659
      %v688 = vmul.f32 %v635, %v659
      %v689 = vmul.f32 %v640, %v659
      %v690 = vmul.f32 %v643, %v659
      %v691 = vmul.f32 %v648, %v659
      %v692 = vmul.f32 %v651, %v659
      %v693 = vld [vmem:[%s4] sm:$0x1]
      %v695 = vlaneseq
      %v696 = vshrl.u32 %v695, 7
      %v697 = vsub.s32 0, %v696
      %v698 = vrot.slane %v693, %v697
      %v700 = vadd.f32 %v661, %v698
      %v701 = vadd.f32 %v662, %v698
      %v702 = vadd.f32 %v663, %v698
      %v703 = vadd.f32 %v664, %v698
      %v704 = vadd.f32 %v665, %v698
      %v705 = vadd.f32 %v666, %v698
      %v706 = vadd.f32 %v667, %v698
      %v707 = vadd.f32 %v668, %v698
      %v708 = vadd.f32 %v669, %v698
      %v709 = vadd.f32 %v670, %v698
      %v710 = vadd.f32 %v671, %v698
      %v711 = vadd.f32 %v672, %v698
      %v712 = vadd.f32 %v673, %v698
      %v713 = vadd.f32 %v674, %v698
      %v714 = vadd.f32 %v675, %v698
      %v715 = vadd.f32 %v676, %v698
      %v716 = vadd.f32 %v677, %v698
      %v717 = vadd.f32 %v678, %v698
      %v718 = vadd.f32 %v679, %v698
      %v719 = vadd.f32 %v680, %v698
      %v720 = vadd.f32 %v681, %v698
      %v721 = vadd.f32 %v682, %v698
      %v722 = vadd.f32 %v683, %v698
      %v723 = vadd.f32 %v684, %v698
      %v724 = vadd.f32 %v685, %v698
      %v725 = vadd.f32 %v686, %v698
      %v726 = vadd.f32 %v687, %v698
      %v727 = vadd.f32 %v688, %v698
      %v728 = vadd.f32 %v689, %v698
      %v729 = vadd.f32 %v690, %v698
      %v730 = vadd.f32 %v691, %v698
      %v731 = vadd.f32 %v692, %v698
      %v732 = vmax.f32 %v700, 0.0
      %v733 = vmax.f32 %v701, 0.0
      %v734 = vmax.f32 %v702, 0.0
      %v735 = vmax.f32 %v703, 0.0
      %v736 = vmax.f32 %v704, 0.0
      %v737 = vmax.f32 %v705, 0.0
      %v738 = vmax.f32 %v706, 0.0
      %v739 = vmax.f32 %v707, 0.0
      %v740 = vmax.f32 %v708, 0.0
      %v741 = vmax.f32 %v709, 0.0
      %v742 = vmax.f32 %v710, 0.0
      %v743 = vmax.f32 %v711, 0.0
      %v744 = vmax.f32 %v712, 0.0
      %v745 = vmax.f32 %v713, 0.0
      %v746 = vmax.f32 %v714, 0.0
      %v747 = vmax.f32 %v715, 0.0
      %v748 = vmax.f32 %v716, 0.0
      %v749 = vmax.f32 %v717, 0.0
      %v750 = vmax.f32 %v718, 0.0
      %v751 = vmax.f32 %v719, 0.0
      %v752 = vmax.f32 %v720, 0.0
      %v753 = vmax.f32 %v721, 0.0
      %v754 = vmax.f32 %v722, 0.0
      %v755 = vmax.f32 %v723, 0.0
      %v756 = vmax.f32 %v724, 0.0
      %v757 = vmax.f32 %v725, 0.0
      %v758 = vmax.f32 %v726, 0.0
      %v759 = vmax.f32 %v727, 0.0
      %v760 = vmax.f32 %v728, 0.0
      %v761 = vmax.f32 %v729, 0.0
      %v762 = vmax.f32 %v730, 0.0
      %v763 = vmax.f32 %v731, 0.0
      %v764 = vld [vmem:[%s0] sm:$0xff]
      %v765 = vld [vmem:[%s0 + $0x8] sm:$0xff]
      %v766 = vld [vmem:[%s0 + $0x10] sm:$0xff]
      %v767 = vld [vmem:[%s0 + $0x18] sm:$0xff]
      %v768 = vld [vmem:[%s0 + $0x20] sm:$0xff]
      %v769 = vld [vmem:[%s0 + $0x28] sm:$0xff]
      %v770 = vld [vmem:[%s0 + $0x30] sm:$0xff]
      %v771 = vld [vmem:[%s0 + $0x38] sm:$0xff]
      %v772 = vld [vmem:[%s0 + $0x40] sm:$0xff]
      %v773 = vld [vmem:[%s0 + $0x48] sm:$0xff]
      %v774 = vld [vmem:[%s0 + $0x50] sm:$0xff]
      %v775 = vld [vmem:[%s0 + $0x58] sm:$0xff]
      %v776 = vld [vmem:[%s0 + $0x60] sm:$0xff]
      %v777 = vld [vmem:[%s0 + $0x68] sm:$0xff]
      %v778 = vld [vmem:[%s0 + $0x70] sm:$0xff]
      %v779 = vld [vmem:[%s0 + $0x78] sm:$0xff]
      %v780 = vld [vmem:[%s0 + $0x80] sm:$0xff]
      %v781 = vld [vmem:[%s0 + $0x88] sm:$0xff]
      %v782 = vld [vmem:[%s0 + $0x90] sm:$0xff]
      %v783 = vld [vmem:[%s0 + $0x98] sm:$0xff]
      %v784 = vld [vmem:[%s0 + $0xa0] sm:$0xff]
      %v785 = vld [vmem:[%s0 + $0xa8] sm:$0xff]
      %v786 = vld [vmem:[%s0 + $0xb0] sm:$0xff]
      %v787 = vld [vmem:[%s0 + $0xb8] sm:$0xff]
      %v788 = vld [vmem:[%s0 + $0xc0] sm:$0xff]
      %v789 = vld [vmem:[%s0 + $0xc8] sm:$0xff]
      %v790 = vld [vmem:[%s0 + $0xd0] sm:$0xff]
      %v791 = vld [vmem:[%s0 + $0xd8] sm:$0xff]
      %v792 = vld [vmem:[%s0 + $0xe0] sm:$0xff]
      %v793 = vld [vmem:[%s0 + $0xe8] sm:$0xff]
      %v794 = vld [vmem:[%s0 + $0xf0] sm:$0xff]
      %v795 = vld [vmem:[%s0 + $0xf8] sm:$0xff]
      %v796 = vlaneseq
      %v797 = vshrl.u32 %v796, 7
      %v798 = vadd.s32 %v797, 8
      %v799 = vadd.s32 %v797, 16
      %v800 = vadd.s32 %v797, 24
      %v801 = vadd.s32 %v797, 32
      %v802 = vadd.s32 %v797, 40
      %v803 = vadd.s32 %v797, 48
      %v804 = vadd.s32 %v797, 56
      %v805 = vadd.s32 %v797, 64
      %v806 = vadd.s32 %v797, 72
      %v807 = vadd.s32 %v797, 80
      %v808 = vadd.s32 %v797, 88
      %v809 = vadd.s32 %v797, 96
      %v810 = vadd.s32 %v797, 104
      %v811 = vadd.s32 %v797, 112
      %v812 = vadd.s32 %v797, 120
      %v813 = vadd.s32 %v797, 128
      %v814 = vadd.s32 %v797, 136
      %v815 = vadd.s32 %v797, 144
      %v816 = vadd.s32 %v797, 152
      %v817 = vadd.s32 %v797, 160
      %v818 = vadd.s32 %v797, 168
      %v819 = vadd.s32 %v797, 176
      %v820 = vadd.s32 %v797, 184
      %v821 = vadd.s32 %v797, 192
      %v822 = vadd.s32 %v797, 200
      %v823 = vadd.s32 %v797, 208
      %v824 = vadd.s32 %v797, 216
      %v825 = vadd.s32 %v797, 224
      %v826 = vadd.s32 %v797, 232
      %v827 = vadd.s32 %v797, 240
      %v828 = vadd.s32 %v797, 248
      %vm829 = vcmp.eq.s32.totalorder %v764, 0
      %vm830 = vcmp.eq.s32.totalorder %v765, 0
      %vm831 = vcmp.eq.s32.totalorder %v766, 0
      %vm832 = vcmp.eq.s32.totalorder %v767, 0
      %vm833 = vcmp.eq.s32.totalorder %v768, 0
      %vm834 = vcmp.eq.s32.totalorder %v769, 0
      %vm835 = vcmp.eq.s32.totalorder %v770, 0
      %vm836 = vcmp.eq.s32.totalorder %v771, 0
      %vm837 = vcmp.eq.s32.totalorder %v772, 0
      %vm838 = vcmp.eq.s32.totalorder %v773, 0
      %vm839 = vcmp.eq.s32.totalorder %v774, 0
      %vm840 = vcmp.eq.s32.totalorder %v775, 0
      %vm841 = vcmp.eq.s32.totalorder %v776, 0
      %vm842 = vcmp.eq.s32.totalorder %v777, 0
      %vm843 = vcmp.eq.s32.totalorder %v778, 0
      %vm844 = vcmp.eq.s32.totalorder %v779, 0
      %vm845 = vcmp.eq.s32.totalorder %v780, 0
      %vm846 = vcmp.eq.s32.totalorder %v781, 0
      %vm847 = vcmp.eq.s32.totalorder %v782, 0
      %vm848 = vcmp.eq.s32.totalorder %v783, 0
      %vm849 = vcmp.eq.s32.totalorder %v784, 0
      %vm850 = vcmp.eq.s32.totalorder %v785, 0
      %vm851 = vcmp.eq.s32.totalorder %v786, 0
      %vm852 = vcmp.eq.s32.totalorder %v787, 0
      %vm853 = vcmp.eq.s32.totalorder %v788, 0
      %vm854 = vcmp.eq.s32.totalorder %v789, 0
      %vm855 = vcmp.eq.s32.totalorder %v790, 0
      %vm856 = vcmp.eq.s32.totalorder %v791, 0
      %vm857 = vcmp.eq.s32.totalorder %v792, 0
      %vm858 = vcmp.eq.s32.totalorder %v793, 0
      %vm859 = vcmp.eq.s32.totalorder %v794, 0
      %vm860 = vcmp.eq.s32.totalorder %v795, 0
      %vm861 = vcmp.eq.s32.totalorder %v764, 15
      %vm862 = vcmp.eq.s32.totalorder %v765, 15
      %vm863 = vcmp.eq.s32.totalorder %v766, 15
      %vm864 = vcmp.eq.s32.totalorder %v767, 15
      %vm865 = vcmp.eq.s32.totalorder %v768, 15
      %vm866 = vcmp.eq.s32.totalorder %v769, 15
      %vm867 = vcmp.eq.s32.totalorder %v770, 15
      %vm868 = vcmp.eq.s32.totalorder %v771, 15
      %vm869 = vcmp.eq.s32.totalorder %v772, 15
      %vm870 = vcmp.eq.s32.totalorder %v773, 15
      %vm871 = vcmp.eq.s32.totalorder %v774, 15
      %vm872 = vcmp.eq.s32.totalorder %v775, 15
      %vm873 = vcmp.eq.s32.totalorder %v776, 15
      %vm874 = vcmp.eq.s32.totalorder %v777, 15
      %vm875 = vcmp.eq.s32.totalorder %v778, 15
      %vm876 = vcmp.eq.s32.totalorder %v779, 15
      %vm877 = vcmp.eq.s32.totalorder %v780, 15
      %vm878 = vcmp.eq.s32.totalorder %v781, 15
      %vm879 = vcmp.eq.s32.totalorder %v782, 15
      %vm880 = vcmp.eq.s32.totalorder %v783, 15
      %vm881 = vcmp.eq.s32.totalorder %v784, 15
      %vm882 = vcmp.eq.s32.totalorder %v785, 15
      %vm883 = vcmp.eq.s32.totalorder %v786, 15
      %vm884 = vcmp.eq.s32.totalorder %v787, 15
      %vm885 = vcmp.eq.s32.totalorder %v788, 15
      %vm886 = vcmp.eq.s32.totalorder %v789, 15
      %vm887 = vcmp.eq.s32.totalorder %v790, 15
      %vm888 = vcmp.eq.s32.totalorder %v791, 15
      %vm889 = vcmp.eq.s32.totalorder %v792, 15
      %vm890 = vcmp.eq.s32.totalorder %v793, 15
      %vm891 = vcmp.eq.s32.totalorder %v794, 15
      %vm892 = vcmp.eq.s32.totalorder %v795, 15
      %vm893 = vcmp.lt.s32.totalorder %v797, 16
      %vm894 = vcmp.lt.s32.totalorder %v798, 16
      %vm895 = vcmp.lt.s32.totalorder %v799, 16
      %vm896 = vcmp.lt.s32.totalorder %v800, 16
      %vm897 = vcmp.lt.s32.totalorder %v801, 16
      %vm898 = vcmp.lt.s32.totalorder %v802, 16
      %vm899 = vcmp.lt.s32.totalorder %v803, 16
      %vm900 = vcmp.lt.s32.totalorder %v804, 16
      %vm901 = vcmp.lt.s32.totalorder %v805, 16
      %vm902 = vcmp.lt.s32.totalorder %v806, 16
      %vm903 = vcmp.lt.s32.totalorder %v807, 16
      %vm904 = vcmp.lt.s32.totalorder %v808, 16
      %vm905 = vcmp.lt.s32.totalorder %v809, 16
      %vm906 = vcmp.lt.s32.totalorder %v810, 16
      %vm907 = vcmp.lt.s32.totalorder %v811, 16
      %vm908 = vcmp.lt.s32.totalorder %v812, 16
      %vm909 = vcmp.lt.s32.totalorder %v813, 16
      %vm910 = vcmp.lt.s32.totalorder %v814, 16
      %vm911 = vcmp.lt.s32.totalorder %v815, 16
      %vm912 = vcmp.lt.s32.totalorder %v816, 16
      %vm913 = vcmp.lt.s32.totalorder %v817, 16
      %vm914 = vcmp.lt.s32.totalorder %v818, 16
      %vm915 = vcmp.lt.s32.totalorder %v819, 16
      %vm916 = vcmp.lt.s32.totalorder %v820, 16
      %vm917 = vcmp.lt.s32.totalorder %v821, 16
      %vm918 = vcmp.lt.s32.totalorder %v822, 16
      %vm919 = vcmp.lt.s32.totalorder %v823, 16
      %vm920 = vcmp.lt.s32.totalorder %v824, 16
      %vm921 = vcmp.lt.s32.totalorder %v825, 16
      %vm922 = vcmp.lt.s32.totalorder %v826, 16
      %vm923 = vcmp.lt.s32.totalorder %v827, 16
      %vm924 = vcmp.lt.s32.totalorder %v828, 16
      %vm925 = vcmp.ge.s32.totalorder %v797, 240
      %vm926 = vcmp.ge.s32.totalorder %v798, 240
      %vm927 = vcmp.ge.s32.totalorder %v799, 240
      %vm928 = vcmp.ge.s32.totalorder %v800, 240
      %vm929 = vcmp.ge.s32.totalorder %v801, 240
      %vm930 = vcmp.ge.s32.totalorder %v802, 240
      %vm931 = vcmp.ge.s32.totalorder %v803, 240
      %vm932 = vcmp.ge.s32.totalorder %v804, 240
      %vm933 = vcmp.ge.s32.totalorder %v805, 240
      %vm934 = vcmp.ge.s32.totalorder %v806, 240
      %vm935 = vcmp.ge.s32.totalorder %v807, 240
      %vm936 = vcmp.ge.s32.totalorder %v808, 240
      %vm937 = vcmp.ge.s32.totalorder %v809, 240
      %vm938 = vcmp.ge.s32.totalorder %v810, 240
      %vm939 = vcmp.ge.s32.totalorder %v811, 240
      %vm940 = vcmp.ge.s32.totalorder %v812, 240
      %vm941 = vcmp.ge.s32.totalorder %v813, 240
      %vm942 = vcmp.ge.s32.totalorder %v814, 240
      %vm943 = vcmp.ge.s32.totalorder %v815, 240
      %vm944 = vcmp.ge.s32.totalorder %v816, 240
      %vm945 = vcmp.ge.s32.totalorder %v817, 240
      %vm946 = vcmp.ge.s32.totalorder %v818, 240
      %vm947 = vcmp.ge.s32.totalorder %v819, 240
      %vm948 = vcmp.ge.s32.totalorder %v820, 240
      %vm949 = vcmp.ge.s32.totalorder %v821, 240
      %vm950 = vcmp.ge.s32.totalorder %v822, 240
      %vm951 = vcmp.ge.s32.totalorder %v823, 240
      %vm952 = vcmp.ge.s32.totalorder %v824, 240
      %vm953 = vcmp.ge.s32.totalorder %v825, 240
      %vm954 = vcmp.ge.s32.totalorder %v826, 240
      %vm955 = vcmp.ge.s32.totalorder %v827, 240
      %vm956 = vcmp.ge.s32.totalorder %v828, 240
      %v957 = vrot.slane %v732, 7
      %v958 = vrot.slane %v733, 7
      %v959 = vrot.slane %v734, 7
      %v960 = vrot.slane %v735, 7
      %v961 = vrot.slane %v736, 7
      %v962 = vrot.slane %v737, 7
      %v963 = vrot.slane %v738, 7
      %v964 = vrot.slane %v739, 7
      %v965 = vrot.slane %v740, 7
      %v966 = vrot.slane %v741, 7
      %v967 = vrot.slane %v742, 7
      %v968 = vrot.slane %v743, 7
      %v969 = vrot.slane %v744, 7
      %v970 = vrot.slane %v745, 7
      %v971 = vrot.slane %v746, 7
      %v972 = vrot.slane %v747, 7
      %v973 = vrot.slane %v748, 7
      %v974 = vrot.slane %v749, 7
      %v975 = vrot.slane %v750, 7
      %v976 = vrot.slane %v751, 7
      %v977 = vrot.slane %v752, 7
      %v978 = vrot.slane %v753, 7
      %v979 = vrot.slane %v754, 7
      %v980 = vrot.slane %v755, 7
      %v981 = vrot.slane %v756, 7
      %v982 = vrot.slane %v757, 7
      %v983 = vrot.slane %v758, 7
      %v984 = vrot.slane %v759, 7
      %v985 = vrot.slane %v760, 7
      %v986 = vrot.slane %v761, 7
      %v987 = vrot.slane %v762, 7
      %v988 = vrot.slane %v763, 7
      %vm989 = vcmp.lt.s32.totalorder %v797, 1
      %v990 = vsel %vm989, %v987, %v988
      %v991 = vsel %vm989, %v986, %v987
      %v992 = vsel %vm989, %v985, %v986
      %v993 = vsel %vm989, %v984, %v985
      %v994 = vsel %vm989, %v983, %v984
      %v995 = vsel %vm989, %v982, %v983
      %v996 = vsel %vm989, %v981, %v982
      %v997 = vsel %vm989, %v980, %v981
      %v998 = vsel %vm989, %v979, %v980
      %v999 = vsel %vm989, %v978, %v979
      %v1000 = vsel %vm989, %v977, %v978
      %v1001 = vsel %vm989, %v976, %v977
      %v1002 = vsel %vm989, %v975, %v976
      %v1003 = vsel %vm989, %v974, %v975
      %v1004 = vsel %vm989, %v973, %v974
      %v1005 = vsel %vm989, %v972, %v973
      %v1006 = vsel %vm989, %v971, %v972
      %v1007 = vsel %vm989, %v970, %v971
      %v1008 = vsel %vm989, %v969, %v970
      %v1009 = vsel %vm989, %v968, %v969
      %v1010 = vsel %vm989, %v967, %v968
      %v1011 = vsel %vm989, %v966, %v967
      %v1012 = vsel %vm989, %v965, %v966
      %v1013 = vsel %vm989, %v964, %v965
      %v1014 = vsel %vm989, %v963, %v964
      %v1015 = vsel %vm989, %v962, %v963
      %v1016 = vsel %vm989, %v961, %v962
      %v1017 = vsel %vm989, %v960, %v961
      %v1018 = vsel %vm989, %v959, %v960
      %v1019 = vsel %vm989, %v958, %v959
      %v1020 = vsel %vm989, %v957, %v958
      %v1021 = vsel %vm989, %v988, %v957
      %v1022 = vsel %vm829, 1, 0
      %v1023 = vsel %vm830, 1, 0
      %v1024 = vsel %vm831, 1, 0
      %v1025 = vsel %vm832, 1, 0
      %v1026 = vsel %vm833, 1, 0
      %v1027 = vsel %vm834, 1, 0
      %v1028 = vsel %vm835, 1, 0
      %v1029 = vsel %vm836, 1, 0
      %v1030 = vsel %vm837, 1, 0
      %v1031 = vsel %vm838, 1, 0
      %v1032 = vsel %vm839, 1, 0
      %v1033 = vsel %vm840, 1, 0
      %v1034 = vsel %vm841, 1, 0
      %v1035 = vsel %vm842, 1, 0
      %v1036 = vsel %vm843, 1, 0
      %v1037 = vsel %vm844, 1, 0
      %v1038 = vsel %vm845, 1, 0
      %v1039 = vsel %vm846, 1, 0
      %v1040 = vsel %vm847, 1, 0
      %v1041 = vsel %vm848, 1, 0
      %v1042 = vsel %vm849, 1, 0
      %v1043 = vsel %vm850, 1, 0
      %v1044 = vsel %vm851, 1, 0
      %v1045 = vsel %vm852, 1, 0
      %v1046 = vsel %vm853, 1, 0
      %v1047 = vsel %vm854, 1, 0
      %v1048 = vsel %vm855, 1, 0
      %v1049 = vsel %vm856, 1, 0
      %v1050 = vsel %vm857, 1, 0
      %v1051 = vsel %vm858, 1, 0
      %v1052 = vsel %vm859, 1, 0
      %v1053 = vsel %vm860, 1, 0
      %1054 = vset.pattern.permute.xlu0 0
      %1055 = vperm.xlu0 %1054, %v1022
      %v1056 = vpop.permute.xlu0 %1055
      %1057 = vset.pattern.permute.xlu0 0
      %1058 = vperm.xlu0 %1057, %v1023
      %v1059 = vpop.permute.xlu0 %1058
      %1060 = vset.pattern.permute.xlu0 0
      %1061 = vperm.xlu0 %1060, %v1024
      %v1062 = vpop.permute.xlu0 %1061
      %1063 = vset.pattern.permute.xlu0 0
      %1064 = vperm.xlu0 %1063, %v1025
      %v1065 = vpop.permute.xlu0 %1064
      %1066 = vset.pattern.permute.xlu0 0
      %1067 = vperm.xlu0 %1066, %v1026
      %v1068 = vpop.permute.xlu0 %1067
      %1069 = vset.pattern.permute.xlu0 0
      %1070 = vperm.xlu0 %1069, %v1027
      %v1071 = vpop.permute.xlu0 %1070
      %1072 = vset.pattern.permute.xlu0 0
      %1073 = vperm.xlu0 %1072, %v1028
      %v1074 = vpop.permute.xlu0 %1073
      %1075 = vset.pattern.permute.xlu0 0
      %1076 = vperm.xlu0 %1075, %v1029
      %v1077 = vpop.permute.xlu0 %1076
      %1078 = vset.pattern.permute.xlu0 0
      %1079 = vperm.xlu0 %1078, %v1030
      %v1080 = vpop.permute.xlu0 %1079
      %1081 = vset.pattern.permute.xlu0 0
      %1082 = vperm.xlu0 %1081, %v1031
      %v1083 = vpop.permute.xlu0 %1082
      %1084 = vset.pattern.permute.xlu0 0
      %1085 = vperm.xlu0 %1084, %v1032
      %v1086 = vpop.permute.xlu0 %1085
      %1087 = vset.pattern.permute.xlu0 0
      %1088 = vperm.xlu0 %1087, %v1033
      %v1089 = vpop.permute.xlu0 %1088
      %1090 = vset.pattern.permute.xlu0 0
      %1091 = vperm.xlu0 %1090, %v1034
      %v1092 = vpop.permute.xlu0 %1091
      %1093 = vset.pattern.permute.xlu0 0
      %1094 = vperm.xlu0 %1093, %v1035
      %v1095 = vpop.permute.xlu0 %1094
      %1096 = vset.pattern.permute.xlu0 0
      %1097 = vperm.xlu0 %1096, %v1036
      %v1098 = vpop.permute.xlu0 %1097
      %1099 = vset.pattern.permute.xlu0 0
      %1100 = vperm.xlu0 %1099, %v1037
      %v1101 = vpop.permute.xlu0 %1100
      %1102 = vset.pattern.permute.xlu0 0
      %1103 = vperm.xlu0 %1102, %v1038
      %v1104 = vpop.permute.xlu0 %1103
      %1105 = vset.pattern.permute.xlu0 0
      %1106 = vperm.xlu0 %1105, %v1039
      %v1107 = vpop.permute.xlu0 %1106
      %1108 = vset.pattern.permute.xlu0 0
      %1109 = vperm.xlu0 %1108, %v1040
      %v1110 = vpop.permute.xlu0 %1109
      %1111 = vset.pattern.permute.xlu0 0
      %1112 = vperm.xlu0 %1111, %v1041
      %v1113 = vpop.permute.xlu0 %1112
      %1114 = vset.pattern.permute.xlu0 0
      %1115 = vperm.xlu0 %1114, %v1042
      %v1116 = vpop.permute.xlu0 %1115
      %1117 = vset.pattern.permute.xlu0 0
      %1118 = vperm.xlu0 %1117, %v1043
      %v1119 = vpop.permute.xlu0 %1118
      %1120 = vset.pattern.permute.xlu0 0
      %1121 = vperm.xlu0 %1120, %v1044
      %v1122 = vpop.permute.xlu0 %1121
      %1123 = vset.pattern.permute.xlu0 0
      %1124 = vperm.xlu0 %1123, %v1045
      %v1125 = vpop.permute.xlu0 %1124
      %1126 = vset.pattern.permute.xlu0 0
      %1127 = vperm.xlu0 %1126, %v1046
      %v1128 = vpop.permute.xlu0 %1127
      %1129 = vset.pattern.permute.xlu0 0
      %1130 = vperm.xlu0 %1129, %v1047
      %v1131 = vpop.permute.xlu0 %1130
      %1132 = vset.pattern.permute.xlu0 0
      %1133 = vperm.xlu0 %1132, %v1048
      %v1134 = vpop.permute.xlu0 %1133
      %1135 = vset.pattern.permute.xlu0 0
      %1136 = vperm.xlu0 %1135, %v1049
      %v1137 = vpop.permute.xlu0 %1136
      %1138 = vset.pattern.permute.xlu0 0
      %1139 = vperm.xlu0 %1138, %v1050
      %v1140 = vpop.permute.xlu0 %1139
      %1141 = vset.pattern.permute.xlu0 0
      %1142 = vperm.xlu0 %1141, %v1051
      %v1143 = vpop.permute.xlu0 %1142
      %1144 = vset.pattern.permute.xlu0 0
      %1145 = vperm.xlu0 %1144, %v1052
      %v1146 = vpop.permute.xlu0 %1145
      %1147 = vset.pattern.permute.xlu0 0
      %1148 = vperm.xlu0 %1147, %v1053
      %v1149 = vpop.permute.xlu0 %1148
      %vm1150 = vcmp.eq.s32.totalorder %v1056, 1
      %vm1151 = vcmp.eq.s32.totalorder %v1059, 1
      %vm1152 = vcmp.eq.s32.totalorder %v1062, 1
      %vm1153 = vcmp.eq.s32.totalorder %v1065, 1
      %vm1154 = vcmp.eq.s32.totalorder %v1068, 1
      %vm1155 = vcmp.eq.s32.totalorder %v1071, 1
      %vm1156 = vcmp.eq.s32.totalorder %v1074, 1
      %vm1157 = vcmp.eq.s32.totalorder %v1077, 1
      %vm1158 = vcmp.eq.s32.totalorder %v1080, 1
      %vm1159 = vcmp.eq.s32.totalorder %v1083, 1
      %vm1160 = vcmp.eq.s32.totalorder %v1086, 1
      %vm1161 = vcmp.eq.s32.totalorder %v1089, 1
      %vm1162 = vcmp.eq.s32.totalorder %v1092, 1
      %vm1163 = vcmp.eq.s32.totalorder %v1095, 1
      %vm1164 = vcmp.eq.s32.totalorder %v1098, 1
      %vm1165 = vcmp.eq.s32.totalorder %v1101, 1
      %vm1166 = vcmp.eq.s32.totalorder %v1104, 1
      %vm1167 = vcmp.eq.s32.totalorder %v1107, 1
      %vm1168 = vcmp.eq.s32.totalorder %v1110, 1
      %vm1169 = vcmp.eq.s32.totalorder %v1113, 1
      %vm1170 = vcmp.eq.s32.totalorder %v1116, 1
      %vm1171 = vcmp.eq.s32.totalorder %v1119, 1
      %vm1172 = vcmp.eq.s32.totalorder %v1122, 1
      %vm1173 = vcmp.eq.s32.totalorder %v1125, 1
      %vm1174 = vcmp.eq.s32.totalorder %v1128, 1
      %vm1175 = vcmp.eq.s32.totalorder %v1131, 1
      %vm1176 = vcmp.eq.s32.totalorder %v1134, 1
      %vm1177 = vcmp.eq.s32.totalorder %v1137, 1
      %vm1178 = vcmp.eq.s32.totalorder %v1140, 1
      %vm1179 = vcmp.eq.s32.totalorder %v1143, 1
      %vm1180 = vcmp.eq.s32.totalorder %v1146, 1
      %vm1181 = vcmp.eq.s32.totalorder %v1149, 1
      %v1182 = vsel %vm1150, 0.0, %v1021
      %v1183 = vsel %vm1151, 0.0, %v1020
      %v1184 = vsel %vm1152, 0.0, %v1019
      %v1185 = vsel %vm1153, 0.0, %v1018
      %v1186 = vsel %vm1154, 0.0, %v1017
      %v1187 = vsel %vm1155, 0.0, %v1016
      %v1188 = vsel %vm1156, 0.0, %v1015
      %v1189 = vsel %vm1157, 0.0, %v1014
      %v1190 = vsel %vm1158, 0.0, %v1013
      %v1191 = vsel %vm1159, 0.0, %v1012
      %v1192 = vsel %vm1160, 0.0, %v1011
      %v1193 = vsel %vm1161, 0.0, %v1010
      %v1194 = vsel %vm1162, 0.0, %v1009
      %v1195 = vsel %vm1163, 0.0, %v1008
      %v1196 = vsel %vm1164, 0.0, %v1007
      %v1197 = vsel %vm1165, 0.0, %v1006
      %v1198 = vsel %vm1166, 0.0, %v1005
      %v1199 = vsel %vm1167, 0.0, %v1004
      %v1200 = vsel %vm1168, 0.0, %v1003
      %v1201 = vsel %vm1169, 0.0, %v1002
      %v1202 = vsel %vm1170, 0.0, %v1001
      %v1203 = vsel %vm1171, 0.0, %v1000
      %v1204 = vsel %vm1172, 0.0, %v999
      %v1205 = vsel %vm1173, 0.0, %v998
      %v1206 = vsel %vm1174, 0.0, %v997
      %v1207 = vsel %vm1175, 0.0, %v996
      %v1208 = vsel %vm1176, 0.0, %v995
      %v1209 = vsel %vm1177, 0.0, %v994
      %v1210 = vsel %vm1178, 0.0, %v993
      %v1211 = vsel %vm1179, 0.0, %v992
      %v1212 = vsel %vm1180, 0.0, %v991
      %v1213 = vsel %vm1181, 0.0, %v990
      %v1214 = vrot.slane %v732, 1
      %v1215 = vrot.slane %v733, 1
      %v1216 = vrot.slane %v734, 1
      %v1217 = vrot.slane %v735, 1
      %v1218 = vrot.slane %v736, 1
      %v1219 = vrot.slane %v737, 1
      %v1220 = vrot.slane %v738, 1
      %v1221 = vrot.slane %v739, 1
      %v1222 = vrot.slane %v740, 1
      %v1223 = vrot.slane %v741, 1
      %v1224 = vrot.slane %v742, 1
      %v1225 = vrot.slane %v743, 1
      %v1226 = vrot.slane %v744, 1
      %v1227 = vrot.slane %v745, 1
      %v1228 = vrot.slane %v746, 1
      %v1229 = vrot.slane %v747, 1
      %v1230 = vrot.slane %v748, 1
      %v1231 = vrot.slane %v749, 1
      %v1232 = vrot.slane %v750, 1
      %v1233 = vrot.slane %v751, 1
      %v1234 = vrot.slane %v752, 1
      %v1235 = vrot.slane %v753, 1
      %v1236 = vrot.slane %v754, 1
      %v1237 = vrot.slane %v755, 1
      %v1238 = vrot.slane %v756, 1
      %v1239 = vrot.slane %v757, 1
      %v1240 = vrot.slane %v758, 1
      %v1241 = vrot.slane %v759, 1
      %v1242 = vrot.slane %v760, 1
      %v1243 = vrot.slane %v761, 1
      %v1244 = vrot.slane %v762, 1
      %v1245 = vrot.slane %v763, 1
      %vm1246 = vcmp.lt.s32.totalorder %v797, 7
      %v1247 = vsel %vm1246, %v1244, %v1245
      %v1248 = vsel %vm1246, %v1243, %v1244
      %v1249 = vsel %vm1246, %v1242, %v1243
      %v1250 = vsel %vm1246, %v1241, %v1242
      %v1251 = vsel %vm1246, %v1240, %v1241
      %v1252 = vsel %vm1246, %v1239, %v1240
      %v1253 = vsel %vm1246, %v1238, %v1239
      %v1254 = vsel %vm1246, %v1237, %v1238
      %v1255 = vsel %vm1246, %v1236, %v1237
      %v1256 = vsel %vm1246, %v1235, %v1236
      %v1257 = vsel %vm1246, %v1234, %v1235
      %v1258 = vsel %vm1246, %v1233, %v1234
      %v1259 = vsel %vm1246, %v1232, %v1233
      %v1260 = vsel %vm1246, %v1231, %v1232
      %v1261 = vsel %vm1246, %v1230, %v1231
      %v1262 = vsel %vm1246, %v1229, %v1230
      %v1263 = vsel %vm1246, %v1228, %v1229
      %v1264 = vsel %vm1246, %v1227, %v1228
      %v1265 = vsel %vm1246, %v1226, %v1227
      %v1266 = vsel %vm1246, %v1225, %v1226
      %v1267 = vsel %vm1246, %v1224, %v1225
      %v1268 = vsel %vm1246, %v1223, %v1224
      %v1269 = vsel %vm1246, %v1222, %v1223
      %v1270 = vsel %vm1246, %v1221, %v1222
      %v1271 = vsel %vm1246, %v1220, %v1221
      %v1272 = vsel %vm1246, %v1219, %v1220
      %v1273 = vsel %vm1246, %v1218, %v1219
      %v1274 = vsel %vm1246, %v1217, %v1218
      %v1275 = vsel %vm1246, %v1216, %v1217
      %v1276 = vsel %vm1246, %v1215, %v1216
      %v1277 = vsel %vm1246, %v1214, %v1215
      %v1278 = vsel %vm1246, %v1245, %v1214
      %v1279 = vsel %vm861, 1, 0
      %v1280 = vsel %vm862, 1, 0
      %v1281 = vsel %vm863, 1, 0
      %v1282 = vsel %vm864, 1, 0
      %v1283 = vsel %vm865, 1, 0
      %v1284 = vsel %vm866, 1, 0
      %v1285 = vsel %vm867, 1, 0
      %v1286 = vsel %vm868, 1, 0
      %v1287 = vsel %vm869, 1, 0
      %v1288 = vsel %vm870, 1, 0
      %v1289 = vsel %vm871, 1, 0
      %v1290 = vsel %vm872, 1, 0
      %v1291 = vsel %vm873, 1, 0
      %v1292 = vsel %vm874, 1, 0
      %v1293 = vsel %vm875, 1, 0
      %v1294 = vsel %vm876, 1, 0
      %v1295 = vsel %vm877, 1, 0
      %v1296 = vsel %vm878, 1, 0
      %v1297 = vsel %vm879, 1, 0
      %v1298 = vsel %vm880, 1, 0
      %v1299 = vsel %vm881, 1, 0
      %v1300 = vsel %vm882, 1, 0
      %v1301 = vsel %vm883, 1, 0
      %v1302 = vsel %vm884, 1, 0
      %v1303 = vsel %vm885, 1, 0
      %v1304 = vsel %vm886, 1, 0
      %v1305 = vsel %vm887, 1, 0
      %v1306 = vsel %vm888, 1, 0
      %v1307 = vsel %vm889, 1, 0
      %v1308 = vsel %vm890, 1, 0
      %v1309 = vsel %vm891, 1, 0
      %v1310 = vsel %vm892, 1, 0
      %1311 = vset.pattern.permute.xlu0 0
      %1312 = vperm.xlu0 %1311, %v1279
      %v1313 = vpop.permute.xlu0 %1312
      %1314 = vset.pattern.permute.xlu0 0
      %1315 = vperm.xlu0 %1314, %v1280
      %v1316 = vpop.permute.xlu0 %1315
      %1317 = vset.pattern.permute.xlu0 0
      %1318 = vperm.xlu0 %1317, %v1281
      %v1319 = vpop.permute.xlu0 %1318
      %1320 = vset.pattern.permute.xlu0 0
      %1321 = vperm.xlu0 %1320, %v1282
      %v1322 = vpop.permute.xlu0 %1321
      %1323 = vset.pattern.permute.xlu0 0
      %1324 = vperm.xlu0 %1323, %v1283
      %v1325 = vpop.permute.xlu0 %1324
      %1326 = vset.pattern.permute.xlu0 0
      %1327 = vperm.xlu0 %1326, %v1284
      %v1328 = vpop.permute.xlu0 %1327
      %1329 = vset.pattern.permute.xlu0 0
      %1330 = vperm.xlu0 %1329, %v1285
      %v1331 = vpop.permute.xlu0 %1330
      %1332 = vset.pattern.permute.xlu0 0
      %1333 = vperm.xlu0 %1332, %v1286
      %v1334 = vpop.permute.xlu0 %1333
      %1335 = vset.pattern.permute.xlu0 0
      %1336 = vperm.xlu0 %1335, %v1287
      %v1337 = vpop.permute.xlu0 %1336
      %1338 = vset.pattern.permute.xlu0 0
      %1339 = vperm.xlu0 %1338, %v1288
      %v1340 = vpop.permute.xlu0 %1339
      %1341 = vset.pattern.permute.xlu0 0
      %1342 = vperm.xlu0 %1341, %v1289
      %v1343 = vpop.permute.xlu0 %1342
      %1344 = vset.pattern.permute.xlu0 0
      %1345 = vperm.xlu0 %1344, %v1290
      %v1346 = vpop.permute.xlu0 %1345
      %1347 = vset.pattern.permute.xlu0 0
      %1348 = vperm.xlu0 %1347, %v1291
      %v1349 = vpop.permute.xlu0 %1348
      %1350 = vset.pattern.permute.xlu0 0
      %1351 = vperm.xlu0 %1350, %v1292
      %v1352 = vpop.permute.xlu0 %1351
      %1353 = vset.pattern.permute.xlu0 0
      %1354 = vperm.xlu0 %1353, %v1293
      %v1355 = vpop.permute.xlu0 %1354
      %1356 = vset.pattern.permute.xlu0 0
      %1357 = vperm.xlu0 %1356, %v1294
      %v1358 = vpop.permute.xlu0 %1357
      %1359 = vset.pattern.permute.xlu0 0
      %1360 = vperm.xlu0 %1359, %v1295
      %v1361 = vpop.permute.xlu0 %1360
      %1362 = vset.pattern.permute.xlu0 0
      %1363 = vperm.xlu0 %1362, %v1296
      %v1364 = vpop.permute.xlu0 %1363
      %1365 = vset.pattern.permute.xlu0 0
      %1366 = vperm.xlu0 %1365, %v1297
      %v1367 = vpop.permute.xlu0 %1366
      %1368 = vset.pattern.permute.xlu0 0
      %1369 = vperm.xlu0 %1368, %v1298
      %v1370 = vpop.permute.xlu0 %1369
      %1371 = vset.pattern.permute.xlu0 0
      %1372 = vperm.xlu0 %1371, %v1299
      %v1373 = vpop.permute.xlu0 %1372
      %1374 = vset.pattern.permute.xlu0 0
      %1375 = vperm.xlu0 %1374, %v1300
      %v1376 = vpop.permute.xlu0 %1375
      %1377 = vset.pattern.permute.xlu0 0
      %1378 = vperm.xlu0 %1377, %v1301
      %v1379 = vpop.permute.xlu0 %1378
      %1380 = vset.pattern.permute.xlu0 0
      %1381 = vperm.xlu0 %1380, %v1302
      %v1382 = vpop.permute.xlu0 %1381
      %1383 = vset.pattern.permute.xlu0 0
      %1384 = vperm.xlu0 %1383, %v1303
      %v1385 = vpop.permute.xlu0 %1384
      %1386 = vset.pattern.permute.xlu0 0
      %1387 = vperm.xlu0 %1386, %v1304
      %v1388 = vpop.permute.xlu0 %1387
      %1389 = vset.pattern.permute.xlu0 0
      %1390 = vperm.xlu0 %1389, %v1305
      %v1391 = vpop.permute.xlu0 %1390
      %1392 = vset.pattern.permute.xlu0 0
      %1393 = vperm.xlu0 %1392, %v1306
      %v1394 = vpop.permute.xlu0 %1393
      %1395 = vset.pattern.permute.xlu0 0
      %1396 = vperm.xlu0 %1395, %v1307
      %v1397 = vpop.permute.xlu0 %1396
      %1398 = vset.pattern.permute.xlu0 0
      %1399 = vperm.xlu0 %1398, %v1308
      %v1400 = vpop.permute.xlu0 %1399
      %1401 = vset.pattern.permute.xlu0 0
      %1402 = vperm.xlu0 %1401, %v1309
      %v1403 = vpop.permute.xlu0 %1402
      %1404 = vset.pattern.permute.xlu0 0
      %1405 = vperm.xlu0 %1404, %v1310
      %v1406 = vpop.permute.xlu0 %1405
      %vm1407 = vcmp.eq.s32.totalorder %v1313, 1
      %vm1408 = vcmp.eq.s32.totalorder %v1316, 1
      %vm1409 = vcmp.eq.s32.totalorder %v1319, 1
      %vm1410 = vcmp.eq.s32.totalorder %v1322, 1
      %vm1411 = vcmp.eq.s32.totalorder %v1325, 1
      %vm1412 = vcmp.eq.s32.totalorder %v1328, 1
      %vm1413 = vcmp.eq.s32.totalorder %v1331, 1
      %vm1414 = vcmp.eq.s32.totalorder %v1334, 1
      %vm1415 = vcmp.eq.s32.totalorder %v1337, 1
      %vm1416 = vcmp.eq.s32.totalorder %v1340, 1
      %vm1417 = vcmp.eq.s32.totalorder %v1343, 1
      %vm1418 = vcmp.eq.s32.totalorder %v1346, 1
      %vm1419 = vcmp.eq.s32.totalorder %v1349, 1
      %vm1420 = vcmp.eq.s32.totalorder %v1352, 1
      %vm1421 = vcmp.eq.s32.totalorder %v1355, 1
      %vm1422 = vcmp.eq.s32.totalorder %v1358, 1
      %vm1423 = vcmp.eq.s32.totalorder %v1361, 1
      %vm1424 = vcmp.eq.s32.totalorder %v1364, 1
      %vm1425 = vcmp.eq.s32.totalorder %v1367, 1
      %vm1426 = vcmp.eq.s32.totalorder %v1370, 1
      %vm1427 = vcmp.eq.s32.totalorder %v1373, 1
      %vm1428 = vcmp.eq.s32.totalorder %v1376, 1
      %vm1429 = vcmp.eq.s32.totalorder %v1379, 1
      %vm1430 = vcmp.eq.s32.totalorder %v1382, 1
      %vm1431 = vcmp.eq.s32.totalorder %v1385, 1
      %vm1432 = vcmp.eq.s32.totalorder %v1388, 1
      %vm1433 = vcmp.eq.s32.totalorder %v1391, 1
      %vm1434 = vcmp.eq.s32.totalorder %v1394, 1
      %vm1435 = vcmp.eq.s32.totalorder %v1397, 1
      %vm1436 = vcmp.eq.s32.totalorder %v1400, 1
      %vm1437 = vcmp.eq.s32.totalorder %v1403, 1
      %vm1438 = vcmp.eq.s32.totalorder %v1406, 1
      %v1439 = vsel %vm1407, 0.0, %v1277
      %v1440 = vsel %vm1408, 0.0, %v1276
      %v1441 = vsel %vm1409, 0.0, %v1275
      %v1442 = vsel %vm1410, 0.0, %v1274
      %v1443 = vsel %vm1411, 0.0, %v1273
      %v1444 = vsel %vm1412, 0.0, %v1272
      %v1445 = vsel %vm1413, 0.0, %v1271
      %v1446 = vsel %vm1414, 0.0, %v1270
      %v1447 = vsel %vm1415, 0.0, %v1269
      %v1448 = vsel %vm1416, 0.0, %v1268
      %v1449 = vsel %vm1417, 0.0, %v1267
      %v1450 = vsel %vm1418, 0.0, %v1266
      %v1451 = vsel %vm1419, 0.0, %v1265
      %v1452 = vsel %vm1420, 0.0, %v1264
      %v1453 = vsel %vm1421, 0.0, %v1263
      %v1454 = vsel %vm1422, 0.0, %v1262
      %v1455 = vsel %vm1423, 0.0, %v1261
      %v1456 = vsel %vm1424, 0.0, %v1260
      %v1457 = vsel %vm1425, 0.0, %v1259
      %v1458 = vsel %vm1426, 0.0, %v1258
      %v1459 = vsel %vm1427, 0.0, %v1257
      %v1460 = vsel %vm1428, 0.0, %v1256
      %v1461 = vsel %vm1429, 0.0, %v1255
      %v1462 = vsel %vm1430, 0.0, %v1254
      %v1463 = vsel %vm1431, 0.0, %v1253
      %v1464 = vsel %vm1432, 0.0, %v1252
      %v1465 = vsel %vm1433, 0.0, %v1251
      %v1466 = vsel %vm1434, 0.0, %v1250
      %v1467 = vsel %vm1435, 0.0, %v1249
      %v1468 = vsel %vm1436, 0.0, %v1248
      %v1469 = vsel %vm1437, 0.0, %v1247
      %v1470 = vsel %vm1438, 0.0, %v1278
      %1503 = vrot.lane.b32.xlu0 %v732, 4
      %v1504 = vpop.permute.xlu0 %1503
      %1505 = vrot.lane.b32.xlu0 %v733, 4
      %v1506 = vpop.permute.xlu0 %1505
      %1507 = vrot.lane.b32.xlu0 %v734, 4
      %v1508 = vpop.permute.xlu0 %1507
      %1509 = vrot.lane.b32.xlu0 %v735, 4
      %v1510 = vpop.permute.xlu0 %1509
      %1511 = vrot.lane.b32.xlu0 %v736, 4
      %v1512 = vpop.permute.xlu0 %1511
      %1513 = vrot.lane.b32.xlu0 %v737, 4
      %v1514 = vpop.permute.xlu0 %1513
      %1515 = vrot.lane.b32.xlu0 %v738, 4
      %v1516 = vpop.permute.xlu0 %1515
      %1517 = vrot.lane.b32.xlu0 %v739, 4
      %v1518 = vpop.permute.xlu0 %1517
      %1519 = vrot.lane.b32.xlu0 %v740, 4
      %v1520 = vpop.permute.xlu0 %1519
      %1521 = vrot.lane.b32.xlu0 %v741, 4
      %v1522 = vpop.permute.xlu0 %1521
      %1523 = vrot.lane.b32.xlu0 %v742, 4
      %v1524 = vpop.permute.xlu0 %1523
      %1525 = vrot.lane.b32.xlu0 %v743, 4
      %v1526 = vpop.permute.xlu0 %1525
      %1527 = vrot.lane.b32.xlu0 %v744, 4
      %v1528 = vpop.permute.xlu0 %1527
      %1529 = vrot.lane.b32.xlu0 %v745, 4
      %v1530 = vpop.permute.xlu0 %1529
      %1531 = vrot.lane.b32.xlu0 %v746, 4
      %v1532 = vpop.permute.xlu0 %1531
      %1533 = vrot.lane.b32.xlu0 %v747, 4
      %v1534 = vpop.permute.xlu0 %1533
      %1535 = vrot.lane.b32.xlu0 %v748, 4
      %v1536 = vpop.permute.xlu0 %1535
      %1537 = vrot.lane.b32.xlu0 %v749, 4
      %v1538 = vpop.permute.xlu0 %1537
      %1539 = vrot.lane.b32.xlu0 %v750, 4
      %v1540 = vpop.permute.xlu0 %1539
      %1541 = vrot.lane.b32.xlu0 %v751, 4
      %v1542 = vpop.permute.xlu0 %1541
      %1543 = vrot.lane.b32.xlu0 %v752, 4
      %v1544 = vpop.permute.xlu0 %1543
      %1545 = vrot.lane.b32.xlu0 %v753, 4
      %v1546 = vpop.permute.xlu0 %1545
      %1547 = vrot.lane.b32.xlu0 %v754, 4
      %v1548 = vpop.permute.xlu0 %1547
      %1549 = vrot.lane.b32.xlu0 %v755, 4
      %v1550 = vpop.permute.xlu0 %1549
      %1551 = vrot.lane.b32.xlu0 %v756, 4
      %v1552 = vpop.permute.xlu0 %1551
      %1553 = vrot.lane.b32.xlu0 %v757, 4
      %v1554 = vpop.permute.xlu0 %1553
      %1555 = vrot.lane.b32.xlu0 %v758, 4
      %v1556 = vpop.permute.xlu0 %1555
      %1557 = vrot.lane.b32.xlu0 %v759, 4
      %v1558 = vpop.permute.xlu0 %1557
      %1559 = vrot.lane.b32.xlu0 %v760, 4
      %v1560 = vpop.permute.xlu0 %1559
      %1561 = vrot.lane.b32.xlu0 %v761, 4
      %v1562 = vpop.permute.xlu0 %1561
      %1563 = vrot.lane.b32.xlu0 %v762, 4
      %v1564 = vpop.permute.xlu0 %1563
      %1565 = vrot.lane.b32.xlu0 %v763, 4
      %v1566 = vpop.permute.xlu0 %1565
      %1631 = vrot.lane.b32.xlu0 %v1439, 8
      %v1632 = vpop.permute.xlu0 %1631
      %1633 = vrot.lane.b32.xlu0 %v1440, 8
      %v1634 = vpop.permute.xlu0 %1633
      %1635 = vrot.lane.b32.xlu0 %v1441, 8
      %v1636 = vpop.permute.xlu0 %1635
      %1637 = vrot.lane.b32.xlu0 %v1442, 8
      %v1638 = vpop.permute.xlu0 %1637
      %1639 = vrot.lane.b32.xlu0 %v1443, 8
      %v1640 = vpop.permute.xlu0 %1639
      %1641 = vrot.lane.b32.xlu0 %v1444, 8
      %v1642 = vpop.permute.xlu0 %1641
      %1643 = vrot.lane.b32.xlu0 %v1445, 8
      %v1644 = vpop.permute.xlu0 %1643
      %1645 = vrot.lane.b32.xlu0 %v1446, 8
      %v1646 = vpop.permute.xlu0 %1645
      %1647 = vrot.lane.b32.xlu0 %v1447, 8
      %v1648 = vpop.permute.xlu0 %1647
      %1649 = vrot.lane.b32.xlu0 %v1448, 8
      %v1650 = vpop.permute.xlu0 %1649
      %1651 = vrot.lane.b32.xlu0 %v1449, 8
      %v1652 = vpop.permute.xlu0 %1651
      %1653 = vrot.lane.b32.xlu0 %v1450, 8
      %v1654 = vpop.permute.xlu0 %1653
      %1655 = vrot.lane.b32.xlu0 %v1451, 8
      %v1656 = vpop.permute.xlu0 %1655
      %1657 = vrot.lane.b32.xlu0 %v1452, 8
      %v1658 = vpop.permute.xlu0 %1657
      %1659 = vrot.lane.b32.xlu0 %v1453, 8
      %v1660 = vpop.permute.xlu0 %1659
      %1661 = vrot.lane.b32.xlu0 %v1454, 8
      %v1662 = vpop.permute.xlu0 %1661
      %1663 = vrot.lane.b32.xlu0 %v1455, 8
      %v1664 = vpop.permute.xlu0 %1663
      %1665 = vrot.lane.b32.xlu0 %v1456, 8
      %v1666 = vpop.permute.xlu0 %1665
      %1667 = vrot.lane.b32.xlu0 %v1457, 8
      %v1668 = vpop.permute.xlu0 %1667
      %1669 = vrot.lane.b32.xlu0 %v1458, 8
      %v1670 = vpop.permute.xlu0 %1669
      %1671 = vrot.lane.b32.xlu0 %v1459, 8
      %v1672 = vpop.permute.xlu0 %1671
      %1673 = vrot.lane.b32.xlu0 %v1460, 8
      %v1674 = vpop.permute.xlu0 %1673
      %1675 = vrot.lane.b32.xlu0 %v1461, 8
      %v1676 = vpop.permute.xlu0 %1675
      %1677 = vrot.lane.b32.xlu0 %v1462, 8
      %v1678 = vpop.permute.xlu0 %1677
      %1679 = vrot.lane.b32.xlu0 %v1463, 8
      %v1680 = vpop.permute.xlu0 %1679
      %1681 = vrot.lane.b32.xlu0 %v1464, 8
      %v1682 = vpop.permute.xlu0 %1681
      %1683 = vrot.lane.b32.xlu0 %v1465, 8
      %v1684 = vpop.permute.xlu0 %1683
      %1685 = vrot.lane.b32.xlu0 %v1466, 8
      %v1686 = vpop.permute.xlu0 %1685
      %1687 = vrot.lane.b32.xlu0 %v1467, 8
      %v1688 = vpop.permute.xlu0 %1687
      %1689 = vrot.lane.b32.xlu0 %v1468, 8
      %v1690 = vpop.permute.xlu0 %1689
      %1691 = vrot.lane.b32.xlu0 %v1469, 8
      %v1692 = vpop.permute.xlu0 %1691
      %1693 = vrot.lane.b32.xlu0 %v1470, 8
      %v1694 = vpop.permute.xlu0 %1693
      %vm1727 = vcmask 31744
      %v1728 = vsel %vm1727, %v1182, %v1504
      %v1729 = vsel %vm1727, %v1183, %v1506
      %v1730 = vsel %vm1727, %v1184, %v1508
      %v1731 = vsel %vm1727, %v1185, %v1510
      %v1732 = vsel %vm1727, %v1186, %v1512
      %v1733 = vsel %vm1727, %v1187, %v1514
      %v1734 = vsel %vm1727, %v1188, %v1516
      %v1735 = vsel %vm1727, %v1189, %v1518
      %v1736 = vsel %vm1727, %v1190, %v1520
      %v1737 = vsel %vm1727, %v1191, %v1522
      %v1738 = vsel %vm1727, %v1192, %v1524
      %v1739 = vsel %vm1727, %v1193, %v1526
      %v1740 = vsel %vm1727, %v1194, %v1528
      %v1741 = vsel %vm1727, %v1195, %v1530
      %v1742 = vsel %vm1727, %v1196, %v1532
      %v1743 = vsel %vm1727, %v1197, %v1534
      %v1744 = vsel %vm1727, %v1198, %v1536
      %v1745 = vsel %vm1727, %v1199, %v1538
      %v1746 = vsel %vm1727, %v1200, %v1540
      %v1747 = vsel %vm1727, %v1201, %v1542
      %v1748 = vsel %vm1727, %v1202, %v1544
      %v1749 = vsel %vm1727, %v1203, %v1546
      %v1750 = vsel %vm1727, %v1204, %v1548
      %v1751 = vsel %vm1727, %v1205, %v1550
      %v1752 = vsel %vm1727, %v1206, %v1552
      %v1753 = vsel %vm1727, %v1207, %v1554
      %v1754 = vsel %vm1727, %v1208, %v1556
      %v1755 = vsel %vm1727, %v1209, %v1558
      %v1756 = vsel %vm1727, %v1210, %v1560
      %v1757 = vsel %vm1727, %v1211, %v1562
      %v1758 = vsel %vm1727, %v1212, %v1564
      %v1759 = vsel %vm1727, %v1213, %v1566
      %vm1760 = vcmask 64512
      %v1761 = vsel %vm1760, %v1728, %v1632
      %v1762 = vsel %vm1760, %v1729, %v1634
      %v1763 = vsel %vm1760, %v1730, %v1636
      %v1764 = vsel %vm1760, %v1731, %v1638
      %v1765 = vsel %vm1760, %v1732, %v1640
      %v1766 = vsel %vm1760, %v1733, %v1642
      %v1767 = vsel %vm1760, %v1734, %v1644
      %v1768 = vsel %vm1760, %v1735, %v1646
      %v1769 = vsel %vm1760, %v1736, %v1648
      %v1770 = vsel %vm1760, %v1737, %v1650
      %v1771 = vsel %vm1760, %v1738, %v1652
      %v1772 = vsel %vm1760, %v1739, %v1654
      %v1773 = vsel %vm1760, %v1740, %v1656
      %v1774 = vsel %vm1760, %v1741, %v1658
      %v1775 = vsel %vm1760, %v1742, %v1660
      %v1776 = vsel %vm1760, %v1743, %v1662
      %v1777 = vsel %vm1760, %v1744, %v1664
      %v1778 = vsel %vm1760, %v1745, %v1666
      %v1779 = vsel %vm1760, %v1746, %v1668
      %v1780 = vsel %vm1760, %v1747, %v1670
      %v1781 = vsel %vm1760, %v1748, %v1672
      %v1782 = vsel %vm1760, %v1749, %v1674
      %v1783 = vsel %vm1760, %v1750, %v1676
      %v1784 = vsel %vm1760, %v1751, %v1678
      %v1785 = vsel %vm1760, %v1752, %v1680
      %v1786 = vsel %vm1760, %v1753, %v1682
      %v1787 = vsel %vm1760, %v1754, %v1684
      %v1788 = vsel %vm1760, %v1755, %v1686
      %v1789 = vsel %vm1760, %v1756, %v1688
      %v1790 = vsel %vm1760, %v1757, %v1690
      %v1791 = vsel %vm1760, %v1758, %v1692
      %v1792 = vsel %vm1760, %v1759, %v1694
      %v1793 = vsel %vm893, 1, 0
      %v1794 = vsel %vm894, 1, 0
      %v1795 = vsel %vm895, 1, 0
      %v1796 = vsel %vm896, 1, 0
      %v1797 = vsel %vm897, 1, 0
      %v1798 = vsel %vm898, 1, 0
      %v1799 = vsel %vm899, 1, 0
      %v1800 = vsel %vm900, 1, 0
      %v1801 = vsel %vm901, 1, 0
      %v1802 = vsel %vm902, 1, 0
      %v1803 = vsel %vm903, 1, 0
      %v1804 = vsel %vm904, 1, 0
      %v1805 = vsel %vm905, 1, 0
      %v1806 = vsel %vm906, 1, 0
      %v1807 = vsel %vm907, 1, 0
      %v1808 = vsel %vm908, 1, 0
      %v1809 = vsel %vm909, 1, 0
      %v1810 = vsel %vm910, 1, 0
      %v1811 = vsel %vm911, 1, 0
      %v1812 = vsel %vm912, 1, 0
      %v1813 = vsel %vm913, 1, 0
      %v1814 = vsel %vm914, 1, 0
      %v1815 = vsel %vm915, 1, 0
      %v1816 = vsel %vm916, 1, 0
      %v1817 = vsel %vm917, 1, 0
      %v1818 = vsel %vm918, 1, 0
      %v1819 = vsel %vm919, 1, 0
      %v1820 = vsel %vm920, 1, 0
      %v1821 = vsel %vm921, 1, 0
      %v1822 = vsel %vm922, 1, 0
      %v1823 = vsel %vm923, 1, 0
      %v1824 = vsel %vm924, 1, 0
      %vm1825 = vcmp.eq.s32.totalorder %v1793, 1
      %vm1826 = vcmp.eq.s32.totalorder %v1794, 1
      %vm1827 = vcmp.eq.s32.totalorder %v1795, 1
      %vm1828 = vcmp.eq.s32.totalorder %v1796, 1
      %vm1829 = vcmp.eq.s32.totalorder %v1797, 1
      %vm1830 = vcmp.eq.s32.totalorder %v1798, 1
      %vm1831 = vcmp.eq.s32.totalorder %v1799, 1
      %vm1832 = vcmp.eq.s32.totalorder %v1800, 1
      %vm1833 = vcmp.eq.s32.totalorder %v1801, 1
      %vm1834 = vcmp.eq.s32.totalorder %v1802, 1
      %vm1835 = vcmp.eq.s32.totalorder %v1803, 1
      %vm1836 = vcmp.eq.s32.totalorder %v1804, 1
      %vm1837 = vcmp.eq.s32.totalorder %v1805, 1
      %vm1838 = vcmp.eq.s32.totalorder %v1806, 1
      %vm1839 = vcmp.eq.s32.totalorder %v1807, 1
      %vm1840 = vcmp.eq.s32.totalorder %v1808, 1
      %vm1841 = vcmp.eq.s32.totalorder %v1809, 1
      %vm1842 = vcmp.eq.s32.totalorder %v1810, 1
      %vm1843 = vcmp.eq.s32.totalorder %v1811, 1
      %vm1844 = vcmp.eq.s32.totalorder %v1812, 1
      %vm1845 = vcmp.eq.s32.totalorder %v1813, 1
      %vm1846 = vcmp.eq.s32.totalorder %v1814, 1
      %vm1847 = vcmp.eq.s32.totalorder %v1815, 1
      %vm1848 = vcmp.eq.s32.totalorder %v1816, 1
      %vm1849 = vcmp.eq.s32.totalorder %v1817, 1
      %vm1850 = vcmp.eq.s32.totalorder %v1818, 1
      %vm1851 = vcmp.eq.s32.totalorder %v1819, 1
      %vm1852 = vcmp.eq.s32.totalorder %v1820, 1
      %vm1853 = vcmp.eq.s32.totalorder %v1821, 1
      %vm1854 = vcmp.eq.s32.totalorder %v1822, 1
      %vm1855 = vcmp.eq.s32.totalorder %v1823, 1
      %vm1856 = vcmp.eq.s32.totalorder %v1824, 1
      %v1857 = vsel %vm1825, 0.0, %v1791
      %v1858 = vsel %vm1826, 0.0, %v1792
      %v1859 = vsel %vm1827, 0.0, %v1761
      %v1860 = vsel %vm1828, 0.0, %v1762
      %v1861 = vsel %vm1829, 0.0, %v1763
      %v1862 = vsel %vm1830, 0.0, %v1764
      %v1863 = vsel %vm1831, 0.0, %v1765
      %v1864 = vsel %vm1832, 0.0, %v1766
      %v1865 = vsel %vm1833, 0.0, %v1767
      %v1866 = vsel %vm1834, 0.0, %v1768
      %v1867 = vsel %vm1835, 0.0, %v1769
      %v1868 = vsel %vm1836, 0.0, %v1770
      %v1869 = vsel %vm1837, 0.0, %v1771
      %v1870 = vsel %vm1838, 0.0, %v1772
      %v1871 = vsel %vm1839, 0.0, %v1773
      %v1872 = vsel %vm1840, 0.0, %v1774
      %v1873 = vsel %vm1841, 0.0, %v1775
      %v1874 = vsel %vm1842, 0.0, %v1776
      %v1875 = vsel %vm1843, 0.0, %v1777
      %v1876 = vsel %vm1844, 0.0, %v1778
      %v1877 = vsel %vm1845, 0.0, %v1779
      %v1878 = vsel %vm1846, 0.0, %v1780
      %v1879 = vsel %vm1847, 0.0, %v1781
      %v1880 = vsel %vm1848, 0.0, %v1782
      %v1881 = vsel %vm1849, 0.0, %v1783
      %v1882 = vsel %vm1850, 0.0, %v1784
      %v1883 = vsel %vm1851, 0.0, %v1785
      %v1884 = vsel %vm1852, 0.0, %v1786
      %v1885 = vsel %vm1853, 0.0, %v1787
      %v1886 = vsel %vm1854, 0.0, %v1788
      %v1887 = vsel %vm1855, 0.0, %v1789
      %v1888 = vsel %vm1856, 0.0, %v1790
      %v1889 = vsel %vm925, 1, 0
      %v1890 = vsel %vm926, 1, 0
      %v1891 = vsel %vm927, 1, 0
      %v1892 = vsel %vm928, 1, 0
      %v1893 = vsel %vm929, 1, 0
      %v1894 = vsel %vm930, 1, 0
      %v1895 = vsel %vm931, 1, 0
      %v1896 = vsel %vm932, 1, 0
      %v1897 = vsel %vm933, 1, 0
      %v1898 = vsel %vm934, 1, 0
      %v1899 = vsel %vm935, 1, 0
      %v1900 = vsel %vm936, 1, 0
      %v1901 = vsel %vm937, 1, 0
      %v1902 = vsel %vm938, 1, 0
      %v1903 = vsel %vm939, 1, 0
      %v1904 = vsel %vm940, 1, 0
      %v1905 = vsel %vm941, 1, 0
      %v1906 = vsel %vm942, 1, 0
      %v1907 = vsel %vm943, 1, 0
      %v1908 = vsel %vm944, 1, 0
      %v1909 = vsel %vm945, 1, 0
      %v1910 = vsel %vm946, 1, 0
      %v1911 = vsel %vm947, 1, 0
      %v1912 = vsel %vm948, 1, 0
      %v1913 = vsel %vm949, 1, 0
      %v1914 = vsel %vm950, 1, 0
      %v1915 = vsel %vm951, 1, 0
      %v1916 = vsel %vm952, 1, 0
      %v1917 = vsel %vm953, 1, 0
      %v1918 = vsel %vm954, 1, 0
      %v1919 = vsel %vm955, 1, 0
      %v1920 = vsel %vm956, 1, 0
      %vm1921 = vcmp.eq.s32.totalorder %v1889, 1
      %vm1922 = vcmp.eq.s32.totalorder %v1890, 1
      %vm1923 = vcmp.eq.s32.totalorder %v1891, 1
      %vm1924 = vcmp.eq.s32.totalorder %v1892, 1
      %vm1925 = vcmp.eq.s32.totalorder %v1893, 1
      %vm1926 = vcmp.eq.s32.totalorder %v1894, 1
      %vm1927 = vcmp.eq.s32.totalorder %v1895, 1
      %vm1928 = vcmp.eq.s32.totalorder %v1896, 1
      %vm1929 = vcmp.eq.s32.totalorder %v1897, 1
      %vm1930 = vcmp.eq.s32.totalorder %v1898, 1
      %vm1931 = vcmp.eq.s32.totalorder %v1899, 1
      %vm1932 = vcmp.eq.s32.totalorder %v1900, 1
      %vm1933 = vcmp.eq.s32.totalorder %v1901, 1
      %vm1934 = vcmp.eq.s32.totalorder %v1902, 1
      %vm1935 = vcmp.eq.s32.totalorder %v1903, 1
      %vm1936 = vcmp.eq.s32.totalorder %v1904, 1
      %vm1937 = vcmp.eq.s32.totalorder %v1905, 1
      %vm1938 = vcmp.eq.s32.totalorder %v1906, 1
      %vm1939 = vcmp.eq.s32.totalorder %v1907, 1
      %vm1940 = vcmp.eq.s32.totalorder %v1908, 1
      %vm1941 = vcmp.eq.s32.totalorder %v1909, 1
      %vm1942 = vcmp.eq.s32.totalorder %v1910, 1
      %vm1943 = vcmp.eq.s32.totalorder %v1911, 1
      %vm1944 = vcmp.eq.s32.totalorder %v1912, 1
      %vm1945 = vcmp.eq.s32.totalorder %v1913, 1
      %vm1946 = vcmp.eq.s32.totalorder %v1914, 1
      %vm1947 = vcmp.eq.s32.totalorder %v1915, 1
      %vm1948 = vcmp.eq.s32.totalorder %v1916, 1
      %vm1949 = vcmp.eq.s32.totalorder %v1917, 1
      %vm1950 = vcmp.eq.s32.totalorder %v1918, 1
      %vm1951 = vcmp.eq.s32.totalorder %v1919, 1
      %vm1952 = vcmp.eq.s32.totalorder %v1920, 1
      %v1953 = vsel %vm1921, 0.0, %v1763
      %v1954 = vsel %vm1922, 0.0, %v1764
      %v1955 = vsel %vm1923, 0.0, %v1765
      %v1956 = vsel %vm1924, 0.0, %v1766
      %v1957 = vsel %vm1925, 0.0, %v1767
      %v1958 = vsel %vm1926, 0.0, %v1768
      %v1959 = vsel %vm1927, 0.0, %v1769
      %v1960 = vsel %vm1928, 0.0, %v1770
      %v1961 = vsel %vm1929, 0.0, %v1771
      %v1962 = vsel %vm1930, 0.0, %v1772
      %v1963 = vsel %vm1931, 0.0, %v1773
      %v1964 = vsel %vm1932, 0.0, %v1774
      %v1965 = vsel %vm1933, 0.0, %v1775
      %v1966 = vsel %vm1934, 0.0, %v1776
      %v1967 = vsel %vm1935, 0.0, %v1777
      %v1968 = vsel %vm1936, 0.0, %v1778
      %v1969 = vsel %vm1937, 0.0, %v1779
      %v1970 = vsel %vm1938, 0.0, %v1780
      %v1971 = vsel %vm1939, 0.0, %v1781
      %v1972 = vsel %vm1940, 0.0, %v1782
      %v1973 = vsel %vm1941, 0.0, %v1783
      %v1974 = vsel %vm1942, 0.0, %v1784
      %v1975 = vsel %vm1943, 0.0, %v1785
      %v1976 = vsel %vm1944, 0.0, %v1786
      %v1977 = vsel %vm1945, 0.0, %v1787
      %v1978 = vsel %vm1946, 0.0, %v1788
      %v1979 = vsel %vm1947, 0.0, %v1789
      %v1980 = vsel %vm1948, 0.0, %v1790
      %v1981 = vsel %vm1949, 0.0, %v1791
      %v1982 = vsel %vm1950, 0.0, %v1792
      %v1983 = vsel %vm1951, 0.0, %v1761
      %v1984 = vsel %vm1952, 0.0, %v1762
      %2017 = vrot.lane.b32.xlu0 %v1761, 12
      %v2018 = vpop.permute.xlu0 %2017
      %2019 = vrot.lane.b32.xlu0 %v1762, 12
      %v2020 = vpop.permute.xlu0 %2019
      %2021 = vrot.lane.b32.xlu0 %v1763, 12
      %v2022 = vpop.permute.xlu0 %2021
      %2023 = vrot.lane.b32.xlu0 %v1764, 12
      %v2024 = vpop.permute.xlu0 %2023
      %2025 = vrot.lane.b32.xlu0 %v1765, 12
      %v2026 = vpop.permute.xlu0 %2025
      %2027 = vrot.lane.b32.xlu0 %v1766, 12
      %v2028 = vpop.permute.xlu0 %2027
      %2029 = vrot.lane.b32.xlu0 %v1767, 12
      %v2030 = vpop.permute.xlu0 %2029
      %2031 = vrot.lane.b32.xlu0 %v1768, 12
      %v2032 = vpop.permute.xlu0 %2031
      %2033 = vrot.lane.b32.xlu0 %v1769, 12
      %v2034 = vpop.permute.xlu0 %2033
      %2035 = vrot.lane.b32.xlu0 %v1770, 12
      %v2036 = vpop.permute.xlu0 %2035
      %2037 = vrot.lane.b32.xlu0 %v1771, 12
      %v2038 = vpop.permute.xlu0 %2037
      %2039 = vrot.lane.b32.xlu0 %v1772, 12
      %v2040 = vpop.permute.xlu0 %2039
      %2041 = vrot.lane.b32.xlu0 %v1773, 12
      %v2042 = vpop.permute.xlu0 %2041
      %2043 = vrot.lane.b32.xlu0 %v1774, 12
      %v2044 = vpop.permute.xlu0 %2043
      %2045 = vrot.lane.b32.xlu0 %v1775, 12
      %v2046 = vpop.permute.xlu0 %2045
      %2047 = vrot.lane.b32.xlu0 %v1776, 12
      %v2048 = vpop.permute.xlu0 %2047
      %2049 = vrot.lane.b32.xlu0 %v1777, 12
      %v2050 = vpop.permute.xlu0 %2049
      %2051 = vrot.lane.b32.xlu0 %v1778, 12
      %v2052 = vpop.permute.xlu0 %2051
      %2053 = vrot.lane.b32.xlu0 %v1779, 12
      %v2054 = vpop.permute.xlu0 %2053
      %2055 = vrot.lane.b32.xlu0 %v1780, 12
      %v2056 = vpop.permute.xlu0 %2055
      %2057 = vrot.lane.b32.xlu0 %v1781, 12
      %v2058 = vpop.permute.xlu0 %2057
      %2059 = vrot.lane.b32.xlu0 %v1782, 12
      %v2060 = vpop.permute.xlu0 %2059
      %2061 = vrot.lane.b32.xlu0 %v1783, 12
      %v2062 = vpop.permute.xlu0 %2061
      %2063 = vrot.lane.b32.xlu0 %v1784, 12
      %v2064 = vpop.permute.xlu0 %2063
      %2065 = vrot.lane.b32.xlu0 %v1785, 12
      %v2066 = vpop.permute.xlu0 %2065
      %2067 = vrot.lane.b32.xlu0 %v1786, 12
      %v2068 = vpop.permute.xlu0 %2067
      %2069 = vrot.lane.b32.xlu0 %v1787, 12
      %v2070 = vpop.permute.xlu0 %2069
      %2071 = vrot.lane.b32.xlu0 %v1788, 12
      %v2072 = vpop.permute.xlu0 %2071
      %2073 = vrot.lane.b32.xlu0 %v1789, 12
      %v2074 = vpop.permute.xlu0 %2073
      %2075 = vrot.lane.b32.xlu0 %v1790, 12
      %v2076 = vpop.permute.xlu0 %2075
      %2077 = vrot.lane.b32.xlu0 %v1791, 12
      %v2078 = vpop.permute.xlu0 %2077
      %2079 = vrot.lane.b32.xlu0 %v1792, 12
      %v2080 = vpop.permute.xlu0 %2079
      %2145 = vrot.lane.b32.xlu0 %v1953, 24
      %v2146 = vpop.permute.xlu0 %2145
      %2147 = vrot.lane.b32.xlu0 %v1954, 24
      %v2148 = vpop.permute.xlu0 %2147
      %2149 = vrot.lane.b32.xlu0 %v1955, 24
      %v2150 = vpop.permute.xlu0 %2149
      %2151 = vrot.lane.b32.xlu0 %v1956, 24
      %v2152 = vpop.permute.xlu0 %2151
      %2153 = vrot.lane.b32.xlu0 %v1957, 24
      %v2154 = vpop.permute.xlu0 %2153
      %2155 = vrot.lane.b32.xlu0 %v1958, 24
      %v2156 = vpop.permute.xlu0 %2155
      %2157 = vrot.lane.b32.xlu0 %v1959, 24
      %v2158 = vpop.permute.xlu0 %2157
      %2159 = vrot.lane.b32.xlu0 %v1960, 24
      %v2160 = vpop.permute.xlu0 %2159
      %2161 = vrot.lane.b32.xlu0 %v1961, 24
      %v2162 = vpop.permute.xlu0 %2161
      %2163 = vrot.lane.b32.xlu0 %v1962, 24
      %v2164 = vpop.permute.xlu0 %2163
      %2165 = vrot.lane.b32.xlu0 %v1963, 24
      %v2166 = vpop.permute.xlu0 %2165
      %2167 = vrot.lane.b32.xlu0 %v1964, 24
      %v2168 = vpop.permute.xlu0 %2167
      %2169 = vrot.lane.b32.xlu0 %v1965, 24
      %v2170 = vpop.permute.xlu0 %2169
      %2171 = vrot.lane.b32.xlu0 %v1966, 24
      %v2172 = vpop.permute.xlu0 %2171
      %2173 = vrot.lane.b32.xlu0 %v1967, 24
      %v2174 = vpop.permute.xlu0 %2173
      %2175 = vrot.lane.b32.xlu0 %v1968, 24
      %v2176 = vpop.permute.xlu0 %2175
      %2177 = vrot.lane.b32.xlu0 %v1969, 24
      %v2178 = vpop.permute.xlu0 %2177
      %2179 = vrot.lane.b32.xlu0 %v1970, 24
      %v2180 = vpop.permute.xlu0 %2179
      %2181 = vrot.lane.b32.xlu0 %v1971, 24
      %v2182 = vpop.permute.xlu0 %2181
      %2183 = vrot.lane.b32.xlu0 %v1972, 24
      %v2184 = vpop.permute.xlu0 %2183
      %2185 = vrot.lane.b32.xlu0 %v1973, 24
      %v2186 = vpop.permute.xlu0 %2185
      %2187 = vrot.lane.b32.xlu0 %v1974, 24
      %v2188 = vpop.permute.xlu0 %2187
      %2189 = vrot.lane.b32.xlu0 %v1975, 24
      %v2190 = vpop.permute.xlu0 %2189
      %2191 = vrot.lane.b32.xlu0 %v1976, 24
      %v2192 = vpop.permute.xlu0 %2191
      %2193 = vrot.lane.b32.xlu0 %v1977, 24
      %v2194 = vpop.permute.xlu0 %2193
      %2195 = vrot.lane.b32.xlu0 %v1978, 24
      %v2196 = vpop.permute.xlu0 %2195
      %2197 = vrot.lane.b32.xlu0 %v1979, 24
      %v2198 = vpop.permute.xlu0 %2197
      %2199 = vrot.lane.b32.xlu0 %v1980, 24
      %v2200 = vpop.permute.xlu0 %2199
      %2201 = vrot.lane.b32.xlu0 %v1981, 24
      %v2202 = vpop.permute.xlu0 %2201
      %2203 = vrot.lane.b32.xlu0 %v1982, 24
      %v2204 = vpop.permute.xlu0 %2203
      %2205 = vrot.lane.b32.xlu0 %v1983, 24
      %v2206 = vpop.permute.xlu0 %2205
      %2207 = vrot.lane.b32.xlu0 %v1984, 24
      %v2208 = vpop.permute.xlu0 %2207
      %vm2241 = vcmask 97280
      %v2242 = vsel %vm2241, %v1857, %v2018
      %v2243 = vsel %vm2241, %v1858, %v2020
      %v2244 = vsel %vm2241, %v1859, %v2022
      %v2245 = vsel %vm2241, %v1860, %v2024
      %v2246 = vsel %vm2241, %v1861, %v2026
      %v2247 = vsel %vm2241, %v1862, %v2028
      %v2248 = vsel %vm2241, %v1863, %v2030
      %v2249 = vsel %vm2241, %v1864, %v2032
      %v2250 = vsel %vm2241, %v1865, %v2034
      %v2251 = vsel %vm2241, %v1866, %v2036
      %v2252 = vsel %vm2241, %v1867, %v2038
      %v2253 = vsel %vm2241, %v1868, %v2040
      %v2254 = vsel %vm2241, %v1869, %v2042
      %v2255 = vsel %vm2241, %v1870, %v2044
      %v2256 = vsel %vm2241, %v1871, %v2046
      %v2257 = vsel %vm2241, %v1872, %v2048
      %v2258 = vsel %vm2241, %v1873, %v2050
      %v2259 = vsel %vm2241, %v1874, %v2052
      %v2260 = vsel %vm2241, %v1875, %v2054
      %v2261 = vsel %vm2241, %v1876, %v2056
      %v2262 = vsel %vm2241, %v1877, %v2058
      %v2263 = vsel %vm2241, %v1878, %v2060
      %v2264 = vsel %vm2241, %v1879, %v2062
      %v2265 = vsel %vm2241, %v1880, %v2064
      %v2266 = vsel %vm2241, %v1881, %v2066
      %v2267 = vsel %vm2241, %v1882, %v2068
      %v2268 = vsel %vm2241, %v1883, %v2070
      %v2269 = vsel %vm2241, %v1884, %v2072
      %v2270 = vsel %vm2241, %v1885, %v2074
      %v2271 = vsel %vm2241, %v1886, %v2076
      %v2272 = vsel %vm2241, %v1887, %v2078
      %v2273 = vsel %vm2241, %v1888, %v2080
      %vm2274 = vcmask 195584
      %v2275 = vsel %vm2274, %v2242, %v2146
      %v2276 = vsel %vm2274, %v2243, %v2148
      %v2277 = vsel %vm2274, %v2244, %v2150
      %v2278 = vsel %vm2274, %v2245, %v2152
      %v2279 = vsel %vm2274, %v2246, %v2154
      %v2280 = vsel %vm2274, %v2247, %v2156
      %v2281 = vsel %vm2274, %v2248, %v2158
      %v2282 = vsel %vm2274, %v2249, %v2160
      %v2283 = vsel %vm2274, %v2250, %v2162
      %v2284 = vsel %vm2274, %v2251, %v2164
      %v2285 = vsel %vm2274, %v2252, %v2166
      %v2286 = vsel %vm2274, %v2253, %v2168
      %v2287 = vsel %vm2274, %v2254, %v2170
      %v2288 = vsel %vm2274, %v2255, %v2172
      %v2289 = vsel %vm2274, %v2256, %v2174
      %v2290 = vsel %vm2274, %v2257, %v2176
      %v2291 = vsel %vm2274, %v2258, %v2178
      %v2292 = vsel %vm2274, %v2259, %v2180
      %v2293 = vsel %vm2274, %v2260, %v2182
      %v2294 = vsel %vm2274, %v2261, %v2184
      %v2295 = vsel %vm2274, %v2262, %v2186
      %v2296 = vsel %vm2274, %v2263, %v2188
      %v2297 = vsel %vm2274, %v2264, %v2190
      %v2298 = vsel %vm2274, %v2265, %v2192
      %v2299 = vsel %vm2274, %v2266, %v2194
      %v2300 = vsel %vm2274, %v2267, %v2196
      %v2301 = vsel %vm2274, %v2268, %v2198
      %v2302 = vsel %vm2274, %v2269, %v2200
      %v2303 = vsel %vm2274, %v2270, %v2202
      %v2304 = vsel %vm2274, %v2271, %v2204
      %v2305 = vsel %vm2274, %v2272, %v2206
      %v2306 = vsel %vm2274, %v2273, %v2208
      %v2307 = vpack.c.bf16 %v2276, %v2275
      %v2308 = vpack.c.bf16 %v2278, %v2277
      %v2309 = vpack.c.bf16 %v2280, %v2279
      %v2310 = vpack.c.bf16 %v2282, %v2281
      %v2311 = vpack.c.bf16 %v2284, %v2283
      %v2312 = vpack.c.bf16 %v2286, %v2285
      %v2313 = vpack.c.bf16 %v2288, %v2287
      %v2314 = vpack.c.bf16 %v2290, %v2289
      %v2315 = vpack.c.bf16 %v2292, %v2291
      %v2316 = vpack.c.bf16 %v2294, %v2293
      %v2317 = vpack.c.bf16 %v2296, %v2295
      %v2318 = vpack.c.bf16 %v2298, %v2297
      %v2319 = vpack.c.bf16 %v2300, %v2299
      %v2320 = vpack.c.bf16 %v2302, %v2301
      %v2321 = vpack.c.bf16 %v2304, %v2303
      %v2322 = vpack.c.bf16 %v2306, %v2305
      %v2323 = vld [vmem:[%s5] sm:$0xf]
      %v2324 = vld [vmem:[%s5 + $0x4] sm:$0xf]
      %v2325 = vld [vmem:[%s5 + $0x8] sm:$0xf]
      %v2326 = vld [vmem:[%s5 + $0xc] sm:$0xf]
      %v2327 = vld [vmem:[%s5 + $0x10] sm:$0x3]
      %v2333 = vunpack.c.l.b16 %v2323
      %v2334 = vunpack.c.l.b16 %v2324
      %v2335 = vunpack.c.l.b16 %v2325
      %v2336 = vunpack.c.l.b16 %v2326
      %v2337 = vunpack.c.l.b16 %v2327
      %v2338 = vpack.c.b16 %v2334, %v2333
      %v2339 = vpack.c.b16 %v2336, %v2335
      %v2340 = vpack.c.b16 %v2337, %v2337
      %vm2343 = vcmask 293888
      %v2345 = vsel %vm2343, %v2307, 0
      %v2348 = vsel %vm2343, %v2308, 0
      %v2351 = vsel %vm2343, %v2309, 0
      %v2354 = vsel %vm2343, %v2310, 0
      %v2357 = vsel %vm2343, %v2311, 0
      %v2360 = vsel %vm2343, %v2312, 0
      %v2363 = vsel %vm2343, %v2313, 0
      %v2366 = vsel %vm2343, %v2314, 0
      %v2369 = vsel %vm2343, %v2315, 0
      %v2372 = vsel %vm2343, %v2316, 0
      %v2375 = vsel %vm2343, %v2317, 0
      %v2378 = vsel %vm2343, %v2318, 0
      %v2381 = vsel %vm2343, %v2319, 0
      %v2384 = vsel %vm2343, %v2320, 0
      %v2387 = vsel %vm2343, %v2321, 0
      %v2390 = vsel %vm2343, %v2322, 0
      %vm2392 = vcmask 1041408
      %v2394 = vsel %vm2392, %v2340, 0
      %2396 = vmatprep.subr.bf16.mxu0 0
      %2397 = vmatpush1.bf16.msra.mxu0 0
      %2398 = vmatprep.subr.bf16.mxu0 0
      %2399 = vmatpush1.bf16.msra.mxu0 0
      %2400 = vmatprep.subr.bf16.mxu0 0
      %2401 = vmatpush1.bf16.msra.mxu0 0
      %2402 = vmatprep.subr.bf16.mxu0 0
      %2403 = vmatpush1.bf16.msra.mxu0 0
      %2404 = vmatprep.subr.bf16.mxu0 0
      %2405 = vmatpush1.bf16.msra.mxu0 0
      %2406 = vmatprep.subr.bf16.mxu0 0
      %2407 = vmatpush1.bf16.msra.mxu0 %v2394
      %2408 = vmatprep.subr.bf16.mxu0 0
      %2409 = vmatpush1.bf16.msra.mxu0 %v2339
      %2410 = vmatprep.subr.bf16.mxu0 0
      %2411 = vmatpush1.bf16.msra.mxu0 %v2338
      %2412 = vmatprep.subr.bf16.mxu0 0
      %2413 = vmatpush2.bf16.msra.mxu0 0
      %2414 = vmatprep.subr.bf16.mxu0 0
      %2415 = vmatpush2.bf16.msra.mxu0 0
      %2416 = vmatprep.subr.bf16.mxu0 0
      %2417 = vmatpush2.bf16.msra.mxu0 0
      %2418 = vmatprep.subr.bf16.mxu0 0
      %2419 = vmatpush2.bf16.msra.mxu0 0
      %2420 = vmatprep.subr.bf16.mxu0 0
      %2421 = vmatpush2.bf16.msra.mxu0 0
      %2422 = vmatprep.subr.bf16.mxu0 0
      %2423 = vmatpush2.bf16.msra.mxu0 0
      %2424 = vmatprep.subr.bf16.mxu0 0
      %2425 = vmatpush2.bf16.msra.mxu0 0
      %2426 = vmatprep.subr.bf16.mxu0 0
      %2427 = vmatpush2.bf16.msra.mxu0 0
      %2428 = vmatprep.mubr.bf16.mxu0 0
      %2429 = vmatmul.mubr.bf16.gmra.mxu0 %v2345
      %v2430 = vpop.f32.mrf.mxu0
      %v2431 = vadd.f32 0.0, %v2430
      %v2432 = vpop.f32.mrf.mxu0
      %v2433 = vpop.f32.mrf.mxu0
      %v2434 = vadd.f32 0.0, %v2433
      %v2435 = vpop.f32.mrf.mxu0
      %2436 = vmatprep.mubr.bf16.mxu0 0
      %2437 = vmatmul.mubr.bf16.gmra.mxu0 %v2348
      %v2438 = vpop.f32.mrf.mxu0
      %v2439 = vadd.f32 0.0, %v2438
      %v2440 = vpop.f32.mrf.mxu0
      %v2441 = vpop.f32.mrf.mxu0
      %v2442 = vadd.f32 0.0, %v2441
      %v2443 = vpop.f32.mrf.mxu0
      %2444 = vmatprep.mubr.bf16.mxu0 0
      %2445 = vmatmul.mubr.bf16.gmra.mxu0 %v2351
      %v2446 = vpop.f32.mrf.mxu0
      %v2447 = vadd.f32 0.0, %v2446
      %v2448 = vpop.f32.mrf.mxu0
      %v2449 = vpop.f32.mrf.mxu0
      %v2450 = vadd.f32 0.0, %v2449
      %v2451 = vpop.f32.mrf.mxu0
      %2452 = vmatprep.mubr.bf16.mxu0 0
      %2453 = vmatmul.mubr.bf16.gmra.mxu0 %v2354
      %v2454 = vpop.f32.mrf.mxu0
      %v2455 = vadd.f32 0.0, %v2454
      %v2456 = vpop.f32.mrf.mxu0
      %v2457 = vpop.f32.mrf.mxu0
      %v2458 = vadd.f32 0.0, %v2457
      %v2459 = vpop.f32.mrf.mxu0
      %2460 = vmatprep.mubr.bf16.mxu0 0
      %2461 = vmatmul.mubr.bf16.gmra.mxu0 %v2357
      %v2462 = vpop.f32.mrf.mxu0
      %v2463 = vadd.f32 0.0, %v2462
      %v2464 = vpop.f32.mrf.mxu0
      %v2465 = vpop.f32.mrf.mxu0
      %v2466 = vadd.f32 0.0, %v2465
      %v2467 = vpop.f32.mrf.mxu0
      %2468 = vmatprep.mubr.bf16.mxu0 0
      %2469 = vmatmul.mubr.bf16.gmra.mxu0 %v2360
      %v2470 = vpop.f32.mrf.mxu0
      %v2471 = vadd.f32 0.0, %v2470
      %v2472 = vpop.f32.mrf.mxu0
      %v2473 = vpop.f32.mrf.mxu0
      %v2474 = vadd.f32 0.0, %v2473
      %v2475 = vpop.f32.mrf.mxu0
      %2476 = vmatprep.mubr.bf16.mxu0 0
      %2477 = vmatmul.mubr.bf16.gmra.mxu0 %v2363
      %v2478 = vpop.f32.mrf.mxu0
      %v2479 = vadd.f32 0.0, %v2478
      %v2480 = vpop.f32.mrf.mxu0
      %v2481 = vpop.f32.mrf.mxu0
      %v2482 = vadd.f32 0.0, %v2481
      %v2483 = vpop.f32.mrf.mxu0
      %2484 = vmatprep.mubr.bf16.mxu0 0
      %2485 = vmatmul.mubr.bf16.gmra.mxu0 %v2366
      %v2486 = vpop.f32.mrf.mxu0
      %v2487 = vadd.f32 0.0, %v2486
      %v2488 = vpop.f32.mrf.mxu0
      %v2489 = vpop.f32.mrf.mxu0
      %v2490 = vadd.f32 0.0, %v2489
      %v2491 = vpop.f32.mrf.mxu0
      %2492 = vmatprep.mubr.bf16.mxu0 0
      %2493 = vmatmul.mubr.bf16.gmra.mxu0 %v2369
      %v2494 = vpop.f32.mrf.mxu0
      %v2495 = vadd.f32 0.0, %v2494
      %v2496 = vpop.f32.mrf.mxu0
      %v2497 = vpop.f32.mrf.mxu0
      %v2498 = vadd.f32 0.0, %v2497
      %v2499 = vpop.f32.mrf.mxu0
      %2500 = vmatprep.mubr.bf16.mxu0 0
      %2501 = vmatmul.mubr.bf16.gmra.mxu0 %v2372
      %v2502 = vpop.f32.mrf.mxu0
      %v2503 = vadd.f32 0.0, %v2502
      %v2504 = vpop.f32.mrf.mxu0
      %v2505 = vpop.f32.mrf.mxu0
      %v2506 = vadd.f32 0.0, %v2505
      %v2507 = vpop.f32.mrf.mxu0
      %2508 = vmatprep.mubr.bf16.mxu0 0
      %2509 = vmatmul.mubr.bf16.gmra.mxu0 %v2375
      %v2510 = vpop.f32.mrf.mxu0
      %v2511 = vadd.f32 0.0, %v2510
      %v2512 = vpop.f32.mrf.mxu0
      %v2513 = vpop.f32.mrf.mxu0
      %v2514 = vadd.f32 0.0, %v2513
      %v2515 = vpop.f32.mrf.mxu0
      %2516 = vmatprep.mubr.bf16.mxu0 0
      %2517 = vmatmul.mubr.bf16.gmra.mxu0 %v2378
      %v2518 = vpop.f32.mrf.mxu0
      %v2519 = vadd.f32 0.0, %v2518
      %v2520 = vpop.f32.mrf.mxu0
      %v2521 = vpop.f32.mrf.mxu0
      %v2522 = vadd.f32 0.0, %v2521
      %v2523 = vpop.f32.mrf.mxu0
      %2524 = vmatprep.mubr.bf16.mxu0 0
      %2525 = vmatmul.mubr.bf16.gmra.mxu0 %v2381
      %v2526 = vpop.f32.mrf.mxu0
      %v2527 = vadd.f32 0.0, %v2526
      %v2528 = vpop.f32.mrf.mxu0
      %v2529 = vpop.f32.mrf.mxu0
      %v2530 = vadd.f32 0.0, %v2529
      %v2531 = vpop.f32.mrf.mxu0
      %2532 = vmatprep.mubr.bf16.mxu0 0
      %2533 = vmatmul.mubr.bf16.gmra.mxu0 %v2384
      %v2534 = vpop.f32.mrf.mxu0
      %v2535 = vadd.f32 0.0, %v2534
      %v2536 = vpop.f32.mrf.mxu0
      %v2537 = vpop.f32.mrf.mxu0
      %v2538 = vadd.f32 0.0, %v2537
      %v2539 = vpop.f32.mrf.mxu0
      %2540 = vmatprep.mubr.bf16.mxu0 0
      %2541 = vmatmul.mubr.bf16.gmra.mxu0 %v2387
      %v2542 = vpop.f32.mrf.mxu0
      %v2543 = vadd.f32 0.0, %v2542
      %v2544 = vpop.f32.mrf.mxu0
      %v2545 = vpop.f32.mrf.mxu0
      %v2546 = vadd.f32 0.0, %v2545
      %v2547 = vpop.f32.mrf.mxu0
      %2548 = vmatprep.mubr.bf16.mxu0 0
      %2549 = vmatmul.mubr.bf16.gmra.mxu0 %v2390
      %v2550 = vpop.f32.mrf.mxu0
      %v2551 = vadd.f32 0.0, %v2550
      %v2552 = vpop.f32.mrf.mxu0
      %v2553 = vpop.f32.mrf.mxu0
      %v2554 = vadd.f32 0.0, %v2553
      %v2555 = vpop.f32.mrf.mxu0
      %2556 = vdwg.mxu0
      %v2557 = vld [vmem:[%s6] sm:$0x1]
      %v2559 = vlaneseq
      %v2560 = vshrl.u32 %v2559, 7
      %v2561 = vsub.s32 0, %v2560
      %v2562 = vrot.slane %v2557, %v2561
      %v2564 = vmul.f32 %v2431, %v2562
      %v2565 = vmul.f32 %v2434, %v2562
      %v2566 = vmul.f32 %v2439, %v2562
      %v2567 = vmul.f32 %v2442, %v2562
      %v2568 = vmul.f32 %v2447, %v2562
      %v2569 = vmul.f32 %v2450, %v2562
      %v2570 = vmul.f32 %v2455, %v2562
      %v2571 = vmul.f32 %v2458, %v2562
      %v2572 = vmul.f32 %v2463, %v2562
      %v2573 = vmul.f32 %v2466, %v2562
      %v2574 = vmul.f32 %v2471, %v2562
      %v2575 = vmul.f32 %v2474, %v2562
      %v2576 = vmul.f32 %v2479, %v2562
      %v2577 = vmul.f32 %v2482, %v2562
      %v2578 = vmul.f32 %v2487, %v2562
      %v2579 = vmul.f32 %v2490, %v2562
      %v2580 = vmul.f32 %v2495, %v2562
      %v2581 = vmul.f32 %v2498, %v2562
      %v2582 = vmul.f32 %v2503, %v2562
      %v2583 = vmul.f32 %v2506, %v2562
      %v2584 = vmul.f32 %v2511, %v2562
      %v2585 = vmul.f32 %v2514, %v2562
      %v2586 = vmul.f32 %v2519, %v2562
      %v2587 = vmul.f32 %v2522, %v2562
      %v2588 = vmul.f32 %v2527, %v2562
      %v2589 = vmul.f32 %v2530, %v2562
      %v2590 = vmul.f32 %v2535, %v2562
      %v2591 = vmul.f32 %v2538, %v2562
      %v2592 = vmul.f32 %v2543, %v2562
      %v2593 = vmul.f32 %v2546, %v2562
      %v2594 = vmul.f32 %v2551, %v2562
      %v2595 = vmul.f32 %v2554, %v2562
      %v2596 = vld [vmem:[%s7] sm:$0x1]
      %v2598 = vlaneseq
      %v2599 = vshrl.u32 %v2598, 7
      %v2600 = vsub.s32 0, %v2599
      %v2601 = vrot.slane %v2596, %v2600
      %v2603 = vadd.f32 %v2564, %v2601
      %v2604 = vadd.f32 %v2565, %v2601
      %v2605 = vadd.f32 %v2566, %v2601
      %v2606 = vadd.f32 %v2567, %v2601
      %v2607 = vadd.f32 %v2568, %v2601
      %v2608 = vadd.f32 %v2569, %v2601
      %v2609 = vadd.f32 %v2570, %v2601
      %v2610 = vadd.f32 %v2571, %v2601
      %v2611 = vadd.f32 %v2572, %v2601
      %v2612 = vadd.f32 %v2573, %v2601
      %v2613 = vadd.f32 %v2574, %v2601
      %v2614 = vadd.f32 %v2575, %v2601
      %v2615 = vadd.f32 %v2576, %v2601
      %v2616 = vadd.f32 %v2577, %v2601
      %v2617 = vadd.f32 %v2578, %v2601
      %v2618 = vadd.f32 %v2579, %v2601
      %v2619 = vadd.f32 %v2580, %v2601
      %v2620 = vadd.f32 %v2581, %v2601
      %v2621 = vadd.f32 %v2582, %v2601
      %v2622 = vadd.f32 %v2583, %v2601
      %v2623 = vadd.f32 %v2584, %v2601
      %v2624 = vadd.f32 %v2585, %v2601
      %v2625 = vadd.f32 %v2586, %v2601
      %v2626 = vadd.f32 %v2587, %v2601
      %v2627 = vadd.f32 %v2588, %v2601
      %v2628 = vadd.f32 %v2589, %v2601
      %v2629 = vadd.f32 %v2590, %v2601
      %v2630 = vadd.f32 %v2591, %v2601
      %v2631 = vadd.f32 %v2592, %v2601
      %v2632 = vadd.f32 %v2593, %v2601
      %v2633 = vadd.f32 %v2594, %v2601
      %v2634 = vadd.f32 %v2595, %v2601
      %v2635 = vmax.f32 %v2603, 0.0
      %v2636 = vmax.f32 %v2604, 0.0
      %v2637 = vmax.f32 %v2605, 0.0
      %v2638 = vmax.f32 %v2606, 0.0
      %v2639 = vmax.f32 %v2607, 0.0
      %v2640 = vmax.f32 %v2608, 0.0
      %v2641 = vmax.f32 %v2609, 0.0
      %v2642 = vmax.f32 %v2610, 0.0
      %v2643 = vmax.f32 %v2611, 0.0
      %v2644 = vmax.f32 %v2612, 0.0
      %v2645 = vmax.f32 %v2613, 0.0
      %v2646 = vmax.f32 %v2614, 0.0
      %v2647 = vmax.f32 %v2615, 0.0
      %v2648 = vmax.f32 %v2616, 0.0
      %v2649 = vmax.f32 %v2617, 0.0
      %v2650 = vmax.f32 %v2618, 0.0
      %v2651 = vmax.f32 %v2619, 0.0
      %v2652 = vmax.f32 %v2620, 0.0
      %v2653 = vmax.f32 %v2621, 0.0
      %v2654 = vmax.f32 %v2622, 0.0
      %v2655 = vmax.f32 %v2623, 0.0
      %v2656 = vmax.f32 %v2624, 0.0
      %v2657 = vmax.f32 %v2625, 0.0
      %v2658 = vmax.f32 %v2626, 0.0
      %v2659 = vmax.f32 %v2627, 0.0
      %v2660 = vmax.f32 %v2628, 0.0
      %v2661 = vmax.f32 %v2629, 0.0
      %v2662 = vmax.f32 %v2630, 0.0
      %v2663 = vmax.f32 %v2631, 0.0
      %v2664 = vmax.f32 %v2632, 0.0
      %v2665 = vmax.f32 %v2633, 0.0
      %v2666 = vmax.f32 %v2634, 0.0
      %v2667 = vpack.c.bf16 %v2636, %v2635
      %v2668 = vpack.c.bf16 %v2638, %v2637
      %v2669 = vpack.c.bf16 %v2640, %v2639
      %v2670 = vpack.c.bf16 %v2642, %v2641
      %v2671 = vpack.c.bf16 %v2644, %v2643
      %v2672 = vpack.c.bf16 %v2646, %v2645
      %v2673 = vpack.c.bf16 %v2648, %v2647
      %v2674 = vpack.c.bf16 %v2650, %v2649
      %v2675 = vpack.c.bf16 %v2652, %v2651
      %v2676 = vpack.c.bf16 %v2654, %v2653
      %v2677 = vpack.c.bf16 %v2656, %v2655
      %v2678 = vpack.c.bf16 %v2658, %v2657
      %v2679 = vpack.c.bf16 %v2660, %v2659
      %v2680 = vpack.c.bf16 %v2662, %v2661
      %v2681 = vpack.c.bf16 %v2664, %v2663
      %v2682 = vpack.c.bf16 %v2666, %v2665
      %v2683 = vld [vmem:[%s8] sm:$0x3]
      %v2685 = vsel %vm1727, %v2667, 0
      %v2688 = vsel %vm1727, %v2668, 0
      %v2691 = vsel %vm1727, %v2669, 0
      %v2694 = vsel %vm1727, %v2670, 0
      %v2697 = vsel %vm1727, %v2671, 0
      %v2700 = vsel %vm1727, %v2672, 0
      %v2703 = vsel %vm1727, %v2673, 0
      %v2706 = vsel %vm1727, %v2674, 0
      %v2709 = vsel %vm1727, %v2675, 0
      %v2712 = vsel %vm1727, %v2676, 0
      %v2715 = vsel %vm1727, %v2677, 0
      %v2718 = vsel %vm1727, %v2678, 0
      %v2721 = vsel %vm1727, %v2679, 0
      %v2724 = vsel %vm1727, %v2680, 0
      %v2727 = vsel %vm1727, %v2681, 0
      %v2730 = vsel %vm1727, %v2682, 0
      %v2733 = vsel %vm2392, %v2683, 0
      %2735 = vmatprep.subr.bf16.mxu0 0
      %2736 = vmatpush1.bf16.msra.mxu0 0
      %2737 = vmatprep.subr.bf16.mxu0 0
      %2738 = vmatpush1.bf16.msra.mxu0 0
      %2739 = vmatprep.subr.bf16.mxu0 0
      %2740 = vmatpush1.bf16.msra.mxu0 0
      %2741 = vmatprep.subr.bf16.mxu0 0
      %2742 = vmatpush1.bf16.msra.mxu0 0
      %2743 = vmatprep.subr.bf16.mxu0 0
      %2744 = vmatpush1.bf16.msra.mxu0 0
      %2745 = vmatprep.subr.bf16.mxu0 0
      %2746 = vmatpush1.bf16.msra.mxu0 0
      %2747 = vmatprep.subr.bf16.mxu0 0
      %2748 = vmatpush1.bf16.msra.mxu0 0
      %2749 = vmatprep.subr.bf16.mxu0 0
      %2750 = vmatpush1.bf16.msra.mxu0 %v2733
      %2751 = vmatprep.subr.bf16.mxu0 0
      %2752 = vmatpush2.bf16.msra.mxu0 0
      %2753 = vmatprep.subr.bf16.mxu0 0
      %2754 = vmatpush2.bf16.msra.mxu0 0
      %2755 = vmatprep.subr.bf16.mxu0 0
      %2756 = vmatpush2.bf16.msra.mxu0 0
      %2757 = vmatprep.subr.bf16.mxu0 0
      %2758 = vmatpush2.bf16.msra.mxu0 0
      %2759 = vmatprep.subr.bf16.mxu0 0
      %2760 = vmatpush2.bf16.msra.mxu0 0
      %2761 = vmatprep.subr.bf16.mxu0 0
      %2762 = vmatpush2.bf16.msra.mxu0 0
      %2763 = vmatprep.subr.bf16.mxu0 0
      %2764 = vmatpush2.bf16.msra.mxu0 0
      %2765 = vmatprep.subr.bf16.mxu0 0
      %2766 = vmatpush2.bf16.msra.mxu0 0
      %2767 = vmatprep.mubr.bf16.mxu0 0
      %2768 = vmatmul.mubr.bf16.gmra.mxu0 %v2685
      %v2769 = vpop.f32.mrf.mxu0
      %v2770 = vadd.f32 0.0, %v2769
      %v2771 = vpop.f32.mrf.mxu0
      %v2772 = vpop.f32.mrf.mxu0
      %v2773 = vadd.f32 0.0, %v2772
      %v2774 = vpop.f32.mrf.mxu0
      %2775 = vmatprep.mubr.bf16.mxu0 0
      %2776 = vmatmul.mubr.bf16.gmra.mxu0 %v2688
      %v2777 = vpop.f32.mrf.mxu0
      %v2778 = vadd.f32 0.0, %v2777
      %v2779 = vpop.f32.mrf.mxu0
      %v2780 = vpop.f32.mrf.mxu0
      %v2781 = vadd.f32 0.0, %v2780
      %v2782 = vpop.f32.mrf.mxu0
      %2783 = vmatprep.mubr.bf16.mxu0 0
      %2784 = vmatmul.mubr.bf16.gmra.mxu0 %v2691
      %v2785 = vpop.f32.mrf.mxu0
      %v2786 = vadd.f32 0.0, %v2785
      %v2787 = vpop.f32.mrf.mxu0
      %v2788 = vpop.f32.mrf.mxu0
      %v2789 = vadd.f32 0.0, %v2788
      %v2790 = vpop.f32.mrf.mxu0
      %2791 = vmatprep.mubr.bf16.mxu0 0
      %2792 = vmatmul.mubr.bf16.gmra.mxu0 %v2694
      %v2793 = vpop.f32.mrf.mxu0
      %v2794 = vadd.f32 0.0, %v2793
      %v2795 = vpop.f32.mrf.mxu0
      %v2796 = vpop.f32.mrf.mxu0
      %v2797 = vadd.f32 0.0, %v2796
      %v2798 = vpop.f32.mrf.mxu0
      %2799 = vmatprep.mubr.bf16.mxu0 0
      %2800 = vmatmul.mubr.bf16.gmra.mxu0 %v2697
      %v2801 = vpop.f32.mrf.mxu0
      %v2802 = vadd.f32 0.0, %v2801
      %v2803 = vpop.f32.mrf.mxu0
      %v2804 = vpop.f32.mrf.mxu0
      %v2805 = vadd.f32 0.0, %v2804
      %v2806 = vpop.f32.mrf.mxu0
      %2807 = vmatprep.mubr.bf16.mxu0 0
      %2808 = vmatmul.mubr.bf16.gmra.mxu0 %v2700
      %v2809 = vpop.f32.mrf.mxu0
      %v2810 = vadd.f32 0.0, %v2809
      %v2811 = vpop.f32.mrf.mxu0
      %v2812 = vpop.f32.mrf.mxu0
      %v2813 = vadd.f32 0.0, %v2812
      %v2814 = vpop.f32.mrf.mxu0
      %2815 = vmatprep.mubr.bf16.mxu0 0
      %2816 = vmatmul.mubr.bf16.gmra.mxu0 %v2703
      %v2817 = vpop.f32.mrf.mxu0
      %v2818 = vadd.f32 0.0, %v2817
      %v2819 = vpop.f32.mrf.mxu0
      %v2820 = vpop.f32.mrf.mxu0
      %v2821 = vadd.f32 0.0, %v2820
      %v2822 = vpop.f32.mrf.mxu0
      %2823 = vmatprep.mubr.bf16.mxu0 0
      %2824 = vmatmul.mubr.bf16.gmra.mxu0 %v2706
      %v2825 = vpop.f32.mrf.mxu0
      %v2826 = vadd.f32 0.0, %v2825
      %v2827 = vpop.f32.mrf.mxu0
      %v2828 = vpop.f32.mrf.mxu0
      %v2829 = vadd.f32 0.0, %v2828
      %v2830 = vpop.f32.mrf.mxu0
      %2831 = vmatprep.mubr.bf16.mxu0 0
      %2832 = vmatmul.mubr.bf16.gmra.mxu0 %v2709
      %v2833 = vpop.f32.mrf.mxu0
      %v2834 = vadd.f32 0.0, %v2833
      %v2835 = vpop.f32.mrf.mxu0
      %v2836 = vpop.f32.mrf.mxu0
      %v2837 = vadd.f32 0.0, %v2836
      %v2838 = vpop.f32.mrf.mxu0
      %2839 = vmatprep.mubr.bf16.mxu0 0
      %2840 = vmatmul.mubr.bf16.gmra.mxu0 %v2712
      %v2841 = vpop.f32.mrf.mxu0
      %v2842 = vadd.f32 0.0, %v2841
      %v2843 = vpop.f32.mrf.mxu0
      %v2844 = vpop.f32.mrf.mxu0
      %v2845 = vadd.f32 0.0, %v2844
      %v2846 = vpop.f32.mrf.mxu0
      %2847 = vmatprep.mubr.bf16.mxu0 0
      %2848 = vmatmul.mubr.bf16.gmra.mxu0 %v2715
      %v2849 = vpop.f32.mrf.mxu0
      %v2850 = vadd.f32 0.0, %v2849
      %v2851 = vpop.f32.mrf.mxu0
      %v2852 = vpop.f32.mrf.mxu0
      %v2853 = vadd.f32 0.0, %v2852
      %v2854 = vpop.f32.mrf.mxu0
      %2855 = vmatprep.mubr.bf16.mxu0 0
      %2856 = vmatmul.mubr.bf16.gmra.mxu0 %v2718
      %v2857 = vpop.f32.mrf.mxu0
      %v2858 = vadd.f32 0.0, %v2857
      %v2859 = vpop.f32.mrf.mxu0
      %v2860 = vpop.f32.mrf.mxu0
      %v2861 = vadd.f32 0.0, %v2860
      %v2862 = vpop.f32.mrf.mxu0
      %2863 = vmatprep.mubr.bf16.mxu0 0
      %2864 = vmatmul.mubr.bf16.gmra.mxu0 %v2721
      %v2865 = vpop.f32.mrf.mxu0
      %v2866 = vadd.f32 0.0, %v2865
      %v2867 = vpop.f32.mrf.mxu0
      %v2868 = vpop.f32.mrf.mxu0
      %v2869 = vadd.f32 0.0, %v2868
      %v2870 = vpop.f32.mrf.mxu0
      %2871 = vmatprep.mubr.bf16.mxu0 0
      %2872 = vmatmul.mubr.bf16.gmra.mxu0 %v2724
      %v2873 = vpop.f32.mrf.mxu0
      %v2874 = vadd.f32 0.0, %v2873
      %v2875 = vpop.f32.mrf.mxu0
      %v2876 = vpop.f32.mrf.mxu0
      %v2877 = vadd.f32 0.0, %v2876
      %v2878 = vpop.f32.mrf.mxu0
      %2879 = vmatprep.mubr.bf16.mxu0 0
      %2880 = vmatmul.mubr.bf16.gmra.mxu0 %v2727
      %v2881 = vpop.f32.mrf.mxu0
      %v2882 = vadd.f32 0.0, %v2881
      %v2883 = vpop.f32.mrf.mxu0
      %v2884 = vpop.f32.mrf.mxu0
      %v2885 = vadd.f32 0.0, %v2884
      %v2886 = vpop.f32.mrf.mxu0
      %2887 = vmatprep.mubr.bf16.mxu0 0
      %2888 = vmatmul.mubr.bf16.gmra.mxu0 %v2730
      %v2889 = vpop.f32.mrf.mxu0
      %v2890 = vadd.f32 0.0, %v2889
      %v2891 = vpop.f32.mrf.mxu0
      %v2892 = vpop.f32.mrf.mxu0
      %v2893 = vadd.f32 0.0, %v2892
      %v2894 = vpop.f32.mrf.mxu0
      %2895 = vdwg.mxu0
      %v2896 = vld [vmem:[%s9] sm:$0x1]
      %v2898 = vlaneseq
      %v2899 = vshrl.u32 %v2898, 7
      %v2900 = vsub.s32 0, %v2899
      %v2901 = vrot.slane %v2896, %v2900
      %v2903 = vmul.f32 %v2770, %v2901
      %v2904 = vmul.f32 %v2773, %v2901
      %v2905 = vmul.f32 %v2778, %v2901
      %v2906 = vmul.f32 %v2781, %v2901
      %v2907 = vmul.f32 %v2786, %v2901
      %v2908 = vmul.f32 %v2789, %v2901
      %v2909 = vmul.f32 %v2794, %v2901
      %v2910 = vmul.f32 %v2797, %v2901
      %v2911 = vmul.f32 %v2802, %v2901
      %v2912 = vmul.f32 %v2805, %v2901
      %v2913 = vmul.f32 %v2810, %v2901
      %v2914 = vmul.f32 %v2813, %v2901
      %v2915 = vmul.f32 %v2818, %v2901
      %v2916 = vmul.f32 %v2821, %v2901
      %v2917 = vmul.f32 %v2826, %v2901
      %v2918 = vmul.f32 %v2829, %v2901
      %v2919 = vmul.f32 %v2834, %v2901
      %v2920 = vmul.f32 %v2837, %v2901
      %v2921 = vmul.f32 %v2842, %v2901
      %v2922 = vmul.f32 %v2845, %v2901
      %v2923 = vmul.f32 %v2850, %v2901
      %v2924 = vmul.f32 %v2853, %v2901
      %v2925 = vmul.f32 %v2858, %v2901
      %v2926 = vmul.f32 %v2861, %v2901
      %v2927 = vmul.f32 %v2866, %v2901
      %v2928 = vmul.f32 %v2869, %v2901
      %v2929 = vmul.f32 %v2874, %v2901
      %v2930 = vmul.f32 %v2877, %v2901
      %v2931 = vmul.f32 %v2882, %v2901
      %v2932 = vmul.f32 %v2885, %v2901
      %v2933 = vmul.f32 %v2890, %v2901
      %v2934 = vmul.f32 %v2893, %v2901
      %v2935 = vld [vmem:[%s10] sm:$0x1]
      %v2937 = vlaneseq
      %v2938 = vshrl.u32 %v2937, 7
      %v2939 = vsub.s32 0, %v2938
      %v2940 = vrot.slane %v2935, %v2939
      %v2942 = vadd.f32 %v2903, %v2940
      %v2943 = vadd.f32 %v2904, %v2940
      %v2944 = vadd.f32 %v2905, %v2940
      %v2945 = vadd.f32 %v2906, %v2940
      %v2946 = vadd.f32 %v2907, %v2940
      %v2947 = vadd.f32 %v2908, %v2940
      %v2948 = vadd.f32 %v2909, %v2940
      %v2949 = vadd.f32 %v2910, %v2940
      %v2950 = vadd.f32 %v2911, %v2940
      %v2951 = vadd.f32 %v2912, %v2940
      %v2952 = vadd.f32 %v2913, %v2940
      %v2953 = vadd.f32 %v2914, %v2940
      %v2954 = vadd.f32 %v2915, %v2940
      %v2955 = vadd.f32 %v2916, %v2940
      %v2956 = vadd.f32 %v2917, %v2940
      %v2957 = vadd.f32 %v2918, %v2940
      %v2958 = vadd.f32 %v2919, %v2940
      %v2959 = vadd.f32 %v2920, %v2940
      %v2960 = vadd.f32 %v2921, %v2940
      %v2961 = vadd.f32 %v2922, %v2940
      %v2962 = vadd.f32 %v2923, %v2940
      %v2963 = vadd.f32 %v2924, %v2940
      %v2964 = vadd.f32 %v2925, %v2940
      %v2965 = vadd.f32 %v2926, %v2940
      %v2966 = vadd.f32 %v2927, %v2940
      %v2967 = vadd.f32 %v2928, %v2940
      %v2968 = vadd.f32 %v2929, %v2940
      %v2969 = vadd.f32 %v2930, %v2940
      %v2970 = vadd.f32 %v2931, %v2940
      %v2971 = vadd.f32 %v2932, %v2940
      %v2972 = vadd.f32 %v2933, %v2940
      %v2973 = vadd.f32 %v2934, %v2940
      %v2974 = vadd.f32 %v2942, %v388
      %v2975 = vadd.f32 %v2943, %v389
      %v2976 = vadd.f32 %v2944, %v390
      %v2977 = vadd.f32 %v2945, %v391
      %v2978 = vadd.f32 %v2946, %v392
      %v2979 = vadd.f32 %v2947, %v393
      %v2980 = vadd.f32 %v2948, %v394
      %v2981 = vadd.f32 %v2949, %v395
      %v2982 = vadd.f32 %v2950, %v396
      %v2983 = vadd.f32 %v2951, %v397
      %v2984 = vadd.f32 %v2952, %v398
      %v2985 = vadd.f32 %v2953, %v399
      %v2986 = vadd.f32 %v2954, %v400
      %v2987 = vadd.f32 %v2955, %v401
      %v2988 = vadd.f32 %v2956, %v402
      %v2989 = vadd.f32 %v2957, %v403
      %v2990 = vadd.f32 %v2958, %v404
      %v2991 = vadd.f32 %v2959, %v405
      %v2992 = vadd.f32 %v2960, %v406
      %v2993 = vadd.f32 %v2961, %v407
      %v2994 = vadd.f32 %v2962, %v408
      %v2995 = vadd.f32 %v2963, %v409
      %v2996 = vadd.f32 %v2964, %v410
      %v2997 = vadd.f32 %v2965, %v411
      %v2998 = vadd.f32 %v2966, %v412
      %v2999 = vadd.f32 %v2967, %v413
      %v3000 = vadd.f32 %v2968, %v414
      %v3001 = vadd.f32 %v2969, %v415
      %v3002 = vadd.f32 %v2970, %v416
      %v3003 = vadd.f32 %v2971, %v417
      %v3004 = vadd.f32 %v2972, %v418
      %v3005 = vadd.f32 %v2973, %v419
      %v3006 = vmax.f32 %v2974, 0.0
      %v3007 = vmax.f32 %v2975, 0.0
      %v3008 = vmax.f32 %v2976, 0.0
      %v3009 = vmax.f32 %v2977, 0.0
      %v3010 = vmax.f32 %v2978, 0.0
      %v3011 = vmax.f32 %v2979, 0.0
      %v3012 = vmax.f32 %v2980, 0.0
      %v3013 = vmax.f32 %v2981, 0.0
      %v3014 = vmax.f32 %v2982, 0.0
      %v3015 = vmax.f32 %v2983, 0.0
      %v3016 = vmax.f32 %v2984, 0.0
      %v3017 = vmax.f32 %v2985, 0.0
      %v3018 = vmax.f32 %v2986, 0.0
      %v3019 = vmax.f32 %v2987, 0.0
      %v3020 = vmax.f32 %v2988, 0.0
      %v3021 = vmax.f32 %v2989, 0.0
      %v3022 = vmax.f32 %v2990, 0.0
      %v3023 = vmax.f32 %v2991, 0.0
      %v3024 = vmax.f32 %v2992, 0.0
      %v3025 = vmax.f32 %v2993, 0.0
      %v3026 = vmax.f32 %v2994, 0.0
      %v3027 = vmax.f32 %v2995, 0.0
      %v3028 = vmax.f32 %v2996, 0.0
      %v3029 = vmax.f32 %v2997, 0.0
      %v3030 = vmax.f32 %v2998, 0.0
      %v3031 = vmax.f32 %v2999, 0.0
      %v3032 = vmax.f32 %v3000, 0.0
      %v3033 = vmax.f32 %v3001, 0.0
      %v3034 = vmax.f32 %v3002, 0.0
      %v3035 = vmax.f32 %v3003, 0.0
      %v3036 = vmax.f32 %v3004, 0.0
      %v3037 = vmax.f32 %v3005, 0.0
      %3038 = vst.msk [vmem:[%s386] sm:$0xff] %vm444, %v3006
      %3039 = vst.msk [vmem:[%s386 + $0x8] sm:$0xff] %vm444, %v3007
      %3040 = vst.msk [vmem:[%s386 + $0x10] sm:$0xff] %vm444, %v3008
      %3041 = vst.msk [vmem:[%s386 + $0x18] sm:$0xff] %vm444, %v3009
      %3042 = vst.msk [vmem:[%s386 + $0x20] sm:$0xff] %vm444, %v3010
      %3043 = vst.msk [vmem:[%s386 + $0x28] sm:$0xff] %vm444, %v3011
      %3044 = vst.msk [vmem:[%s386 + $0x30] sm:$0xff] %vm444, %v3012
      %3045 = vst.msk [vmem:[%s386 + $0x38] sm:$0xff] %vm444, %v3013
      %3046 = vst.msk [vmem:[%s386 + $0x40] sm:$0xff] %vm444, %v3014
      %3047 = vst.msk [vmem:[%s386 + $0x48] sm:$0xff] %vm444, %v3015
      %3048 = vst.msk [vmem:[%s386 + $0x50] sm:$0xff] %vm444, %v3016
      %3049 = vst.msk [vmem:[%s386 + $0x58] sm:$0xff] %vm444, %v3017
      %3050 = vst.msk [vmem:[%s386 + $0x60] sm:$0xff] %vm444, %v3018
      %3051 = vst.msk [vmem:[%s386 + $0x68] sm:$0xff] %vm444, %v3019
      %3052 = vst.msk [vmem:[%s386 + $0x70] sm:$0xff] %vm444, %v3020
      %3053 = vst.msk [vmem:[%s386 + $0x78] sm:$0xff] %vm444, %v3021
      %3054 = vst.msk [vmem:[%s386 + $0x80] sm:$0xff] %vm444, %v3022
      %3055 = vst.msk [vmem:[%s386 + $0x88] sm:$0xff] %vm444, %v3023
      %3056 = vst.msk [vmem:[%s386 + $0x90] sm:$0xff] %vm444, %v3024
      %3057 = vst.msk [vmem:[%s386 + $0x98] sm:$0xff] %vm444, %v3025
      %3058 = vst.msk [vmem:[%s386 + $0xa0] sm:$0xff] %vm444, %v3026
      %3059 = vst.msk [vmem:[%s386 + $0xa8] sm:$0xff] %vm444, %v3027
      %3060 = vst.msk [vmem:[%s386 + $0xb0] sm:$0xff] %vm444, %v3028
      %3061 = vst.msk [vmem:[%s386 + $0xb8] sm:$0xff] %vm444, %v3029
      %3062 = vst.msk [vmem:[%s386 + $0xc0] sm:$0xff] %vm444, %v3030
      %3063 = vst.msk [vmem:[%s386 + $0xc8] sm:$0xff] %vm444, %v3031
      %3064 = vst.msk [vmem:[%s386 + $0xd0] sm:$0xff] %vm444, %v3032
      %3065 = vst.msk [vmem:[%s386 + $0xd8] sm:$0xff] %vm444, %v3033
      %3066 = vst.msk [vmem:[%s386 + $0xe0] sm:$0xff] %vm444, %v3034
      %3067 = vst.msk [vmem:[%s386 + $0xe8] sm:$0xff] %vm444, %v3035
      %3068 = vst.msk [vmem:[%s386 + $0xf0] sm:$0xff] %vm444, %v3036
      %3069 = vst.msk [vmem:[%s386 + $0xf8] sm:$0xff] %vm444, %v3037
      %p3070 = scmp.lt.s32.totalorder %s22, 1
      %s3071 = scalar_select %p3070, %s22, 1
      %s3072 = smul.addr %s3071, 32
      %s3073 = smul.addr %s3072, 8
      %s3074 = scalar_lea.vmem %s11, %s3073
      // Predicated region
      $region65: #{tpu_custom_call.1} parent=63 // pred_check
        %p3075 = pneg %p276
      $region66: #{tpu_custom_call.1} parent=63 // pred_check_branch
        %3077 = sbr.rel (%p3075) target = $region68
      $region67: #{tpu_custom_call.1} parent=63 // pred_region
        _
      $region68: #{tpu_custom_call.1} parent=63 // pred_fallthru
        _
    $region64: #{tpu_custom_call.1} parent=5 // pred_fallthru
      _
    %p3078 = scmp.le.s32.totalorder 2, %s17
    // Predicated region
    $region69: #{tpu_custom_call.1} parent=5 // pred_check
      %p3079 = pneg %p3078
    $region70: #{tpu_custom_call.1} parent=5 // pred_check_branch
      %3081 = sbr.rel (%p3079) target = $region72
    $region71: #{tpu_custom_call.1} parent=5 // pred_region
      %s3082 = ssub.s32 %s17, 2
      // Predicated region
      $region73: #{tpu_custom_call.1} parent=71 // pred_check
        %p3083 = pneg %p282
      $region74: #{tpu_custom_call.1} parent=71 // pred_check_branch
        %3085 = sbr.rel (%p3083) target = $region76
      $region75: #{tpu_custom_call.1} parent=71 // pred_region
        %p3086 = scmp.lt.s32.totalorder %s23, 1
        %s3087 = scalar_select %p3086, %s23, 1
        %s3088 = smul.addr %s3087, 32
        %s3089 = smul.addr %s3088, 8
        %s3090 = scalar_lea.vmem %s11, %s3089
      $region76: #{tpu_custom_call.1} parent=71 // pred_fallthru
        _
    $region72: #{tpu_custom_call.1} parent=5 // pred_fallthru
      _
  $region6: #{tpu_custom_call.1} parent=0 // loop_footer
    %s21 = sadd.s32 1, %s17
  $region7: #{tpu_custom_call.1} parent=0 // loop_footer_branch
    %16 = sbr.rel target = $region3
  $region8: #{tpu_custom_call.1} parent=0 // loop_exit
    _

</llo_original>
